<compile_context>
chip_gen: v5e
topology: v5e:2x2
jax: 0.10.0
libtpu: 0.0.40
codegen_flags: <defaults>
</compile_context>

<pallas_src>
import functools

import jax
import jax.numpy as jnp
import numpy as np
from jax import lax
from jax.experimental import pallas as pl
from jax.experimental.pallas import tpu as pltpu

EPS = 1e-5


def unet_conv_block_kernel(x_ref, w1_ref, w2_ref, p_ref, o_ref, h1_ref, *,
                           height, width, approx_silu):
    """One grid step: nb samples of conv1->GN->SiLU->conv2->GN->SiLU.

    x_ref : (nb, Cin, H*W) f32     -- channels in sublanes, pixels in lanes.
    w*_ref: (4, Cout, C_in_stage)  -- tap k = kh*2 + kw, compute dtype.
    p_ref : (Cout, 6) f32          -- columns [b1, g1, be1, b2, g2, be2].
    o_ref : (nb, Cout, H*W) f32 output.
    h1_ref: (nb, Cout, H*W) compute-dtype VMEM scratch (stage-1 activations).
    """
    nb, cin, hp = x_ref.shape
    cout = o_ref.shape[1]
    cdtype = w1_ref.dtype
    inv_n = 1.0 / float(cout * hp)

    # Boundary masks for the pad-low-0 / pad-high-1 'same' conv; shared by both
    # stages and by every sample (rows of the flattened slab are whole images,
    # so a lane roll never mixes samples).
    pix = lax.broadcasted_iota(jnp.int32, (1, hp), 1)
    w_mask = (pix % width) == (width - 1)          # w == W-1 (pad-high column)
    h_mask = pix >= (height - 1) * width           # h == H-1 (pad-high row)
    wh_mask = jnp.logical_or(w_mask, h_mask)

    # Tiny grid-constant parameter loads, hoisted.
    p = p_ref[...]                                  # (Cout, 6) f32
    w1 = w1_ref[...]                                # (4, Cout, Cin)
    w2 = w2_ref[...]                                # (4, Cout, Cout)

    def stage(x_all, w4, bias, gamma, beta, out_ref):
        # x_all: (nb*cs, hp) in compute dtype. Tap (kh, kw) reads pixel
        # p + kh*W + kw, i.e. roll by hp - shift with the wrapped / out-of-image
        # lanes masked to the zero padding value.  Done ONCE for all samples.
        cs = x_all.shape[0] // nb
        zero = jnp.zeros_like(x_all)
        t01 = jnp.where(w_mask, zero, pltpu.roll(x_all, hp - 1, axis=1))
        t10 = jnp.where(h_mask, zero, pltpu.roll(x_all, hp - width, axis=1))
        t11 = jnp.where(wh_mask, zero, pltpu.roll(x_all, hp - width - 1, axis=1))
        wk = [w4[k] for k in range(4)]              # 4 x (cout, cs)
        bsum = jnp.sum(bias)
        bsqsum = jnp.sum(bias * bias)

        # nb is capped (<= 8) by the wrapper, so this static unroll stays small.
        for s in range(nb):
            lo, hi = s * cs, (s + 1) * cs
            # 2x2 'same' conv as 4 accumulating MXU dots (f32 accumulation).
            y = jnp.dot(wk[0], x_all[lo:hi], preferred_element_type=jnp.float32)
            y = y + jnp.dot(wk[1], t01[lo:hi], preferred_element_type=jnp.float32)
            y = y + jnp.dot(wk[2], t10[lo:hi], preferred_element_type=jnp.float32)
            y = y + jnp.dot(wk[3], t11[lo:hi], preferred_element_type=jnp.float32)

            # GroupNorm(1): single-pass stats (sum + sum-of-squares), with the
            # conv bias folded in analytically via per-channel row sums so the
            # full-size "y + b" pass disappears.
            rowsum = jnp.sum(y, axis=1, keepdims=True)          # (cout, 1)
            tot = jnp.sum(rowsum)
            totsq = jnp.sum(y * y)
            mu = (tot + hp * bsum) * inv_n
            ex2 = (totsq + 2.0 * jnp.sum(bias * rowsum) + hp * bsqsum) * inv_n
            inv_std = lax.rsqrt(jnp.maximum(ex2 - mu * mu, 0.0) + EPS)

            # Fused epilogue: out = y * a + c  (a, c per-channel), then SiLU.
            a = gamma * inv_std                                  # (cout, 1)
            c = (bias - mu) * (gamma * inv_std) + beta           # (cout, 1)
            z = y * a + c
            sig = pl.reciprocal(1.0 + jnp.exp(jnp.minimum(-z, 80.0)),
                                approx=approx_silu)
            out_ref[s] = (z * sig).astype(out_ref.dtype)

    # Cast to compute dtype IMMEDIATELY after load so rolls/masks run packed.
    x_all = x_ref[...].astype(cdtype).reshape(nb * cin, hp)
    stage(x_all, w1, p[:, 0:1], p[:, 1:2], p[:, 2:3], h1_ref)

    h_all = h1_ref[...].reshape(nb * cout, hp)      # already compute dtype
    stage(h_all, w2, p[:, 3:4], p[:, 4:5], p[:, 5:6], o_ref)


def unet_conv_block(x_nchw, params, *, compute_dtype=jnp.bfloat16,
                    block_n=None, single_buffer_consts=False):
    """x_nchw: (N, Cin, H, W) float32.  Returns (N, Cout, H, W) float32."""
    w1, b1, g1, be1, w2, b2, g2, be2 = params       # w*: HWIO (2, 2, Ci, Co)
    N, Cin, H, W = x_nchw.shape
    Cout = w1.shape[-1]
    HP = H * W
    cdtype = jnp.dtype(compute_dtype)
    cbytes = cdtype.itemsize

    # NCHW -> (N, C, H*W): free reshape, lane-dense I/O DMAs.
    x = x_nchw.reshape(N, Cin, HP)

    # HWIO (2,2,Ci,Co) -> (4, Co, Ci); tap index k = kh*2 + kw.
    w1k = jnp.transpose(w1.reshape(4, Cin, Cout), (0, 2, 1)).astype(cdtype)
    w2k = jnp.transpose(w2.reshape(4, Cout, Cout), (0, 2, 1)).astype(cdtype)
    # All per-channel params packed into one (Cout, 6) input (one DMA).
    pvec = jnp.stack([b1, g1, be1, b2, g2, be2], axis=1).astype(jnp.float32)

    # ---- samples per grid step: ~16 MiB per-step target, no forced split,
    #      capped at 8 to bound the static per-sample unroll. ----
    if block_n is None:
        per_sample = HP * ((Cin + Cout) * 4 * 2            # dbl-buffered f32 I/O
                           + (4 * Cin + 5 * Cout) * cbytes  # hoisted taps + h1
                           + 6 * Cout * 4)                  # f32 accum/epilogue tmp
        block_n = max(1, min(N, (16 << 20) // max(per_sample, 1), 8))
    block_n = max(1, min(block_n, N))
    while N % block_n:
        block_n -= 1
    nb = block_n
    grid = (N // nb,)

    # ---- VMEM limit: generation-aware, conservative (fits v7x 64 MiB). ----
    try:
        vmem_cap = int(getattr(pltpu.get_tpu_info(), "vmem_capacity_bytes",
                               64 << 20))
    except Exception:
        vmem_cap = 64 << 20
    need = (2 * nb * HP * (Cin + Cout) * 4
            + nb * HP * (4 * Cin + 5 * Cout) * cbytes
            + nb * HP * 6 * Cout * 4
            + 2 * (4 * Cout * (Cin + Cout) * cbytes + Cout * 6 * 4))
    upper = min(40 << 20, vmem_cap * 5 // 8)
    vmem_limit = int(max(min(need + (8 << 20), upper), 16 << 20))

    approx_silu = cdtype != jnp.dtype(jnp.float32)
    kernel = functools.partial(unet_conv_block_kernel, height=H, width=W,
                               approx_silu=approx_silu)

    # Grid-constant operands (weights / packed params).  On v7x at production
    # widths set single_buffer_consts=True to drop their double buffers.
    const_kw = dict(pipeline_mode=pl.Buffered(1)) if single_buffer_consts else {}
    in_specs = [
        pl.BlockSpec((nb, Cin, HP), lambda i: (i, 0, 0)),
        pl.BlockSpec((4, Cout, Cin), lambda i: (0, 0, 0), **const_kw),
        pl.BlockSpec((4, Cout, Cout), lambda i: (0, 0, 0), **const_kw),
        pl.BlockSpec((Cout, 6), lambda i: (0, 0), **const_kw),
    ]

    out = pl.pallas_call(
        kernel,
        out_shape=jax.ShapeDtypeStruct((N, Cout, HP), x_nchw.dtype),
        grid_spec=pltpu.PrefetchScalarGridSpec(
            num_scalar_prefetch=0,
            grid=grid,
            in_specs=in_specs,
            out_specs=pl.BlockSpec((nb, Cout, HP), lambda i: (i, 0, 0)),
            scratch_shapes=[pltpu.VMEM((nb, Cout, HP), cdtype)],
        ),
        compiler_params=pltpu.CompilerParams(
            dimension_semantics=("parallel",),
            vmem_limit_bytes=vmem_limit),
    )(x, w1k, w2k, pvec)

    return out.reshape(N, Cout, H, W)


def reference_forward(x_nchw, params):
    """Plain-JAX reference mirroring the PyTorch forward (t=None, no attention)."""
    w1, b1, g1, be1, w2, b2, g2, be2 = params

    def conv(a, w, b):  # a: NHWC, w: HWIO; PyTorch 'same' even kernel: pad (0,1)
        o = lax.conv_general_dilated(
            a, w, window_strides=(1, 1), padding=((0, 1), (0, 1)),
            dimension_numbers=("NHWC", "HWIO", "NHWC"))
        return o + b

    def gn(a, g, be):
        mu = jnp.mean(a, axis=(1, 2, 3), keepdims=True)
        var = jnp.mean((a - mu) ** 2, axis=(1, 2, 3), keepdims=True)
        return (a - mu) * lax.rsqrt(var + EPS) * g + be

    silu = lambda v: v * jax.nn.sigmoid(v)

    a = jnp.transpose(x_nchw, (0, 2, 3, 1))
    h = silu(gn(conv(a, w1, b1), g1, be1))
    h = silu(gn(conv(h, w2, b2), g2, be2))
    return jnp.transpose(h, (0, 3, 1, 2))


if __name__ == "__main__":
    N, Cin, Cout, H, W = 2, 4, 8, 16, 16

    key = jax.random.PRNGKey(0)
    ks = jax.random.split(key, 9)
    s1 = 1.0 / np.sqrt(Cin * 2 * 2)     # PyTorch Conv2d default init bound
    s2 = 1.0 / np.sqrt(Cout * 2 * 2)

    w1 = jax.random.uniform(ks[0], (2, 2, Cin, Cout), jnp.float32, -s1, s1)   # HWIO
    b1 = jax.random.uniform(ks[1], (Cout,), jnp.float32, -s1, s1)
    w2 = jax.random.uniform(ks[2], (2, 2, Cout, Cout), jnp.float32, -s2, s2)  # HWIO
    b2 = jax.random.uniform(ks[3], (Cout,), jnp.float32, -s2, s2)
    g1 = 1.0 + 0.1 * jax.random.normal(ks[4], (Cout,), jnp.float32)
    be1 = 0.1 * jax.random.normal(ks[5], (Cout,), jnp.float32)
    g2 = 1.0 + 0.1 * jax.random.normal(ks[6], (Cout,), jnp.float32)
    be2 = 0.1 * jax.random.normal(ks[7], (Cout,), jnp.float32)

    x = jax.random.normal(ks[8], (N, Cin, H, W), jnp.float32)
    params = (w1, b1, g1, be1, w2, b2, g2, be2)

    ref = jax.block_until_ready(reference_forward(x, params))

    # Exact path (f32 MXU operands) -- tight tolerance.
    fwd_f32 = jax.jit(functools.partial(unet_conv_block,
                                        compute_dtype=jnp.float32))
    out_f32 = jax.block_until_ready(fwd_f32(x, params))
    np.testing.assert_allclose(np.asarray(out_f32), np.asarray(ref),
                               rtol=2e-4, atol=2e-4)

    # Default fast path (bf16 MXU / roll / mask work, f32 accumulation & stats).
    fwd_bf16 = jax.jit(unet_conv_block)
    out_bf16 = jax.block_until_ready(fwd_bf16(x, params))
    np.testing.assert_allclose(np.asarray(out_bf16), np.asarray(ref),
                               rtol=5e-2, atol=5e-2)

    print("KERNEL_OK")
</pallas_src>

<mosaic_0001>
module attributes {stable_mosaic.version = 11 : i64} {
  func.func @unet_conv_block_kernel(%arg0: i32, %arg1: memref<2x4x256xf32, #tpu.memory_space<vmem>>, %arg2: memref<4x8x4xf32, #tpu.memory_space<vmem>>, %arg3: memref<4x8x8xf32, #tpu.memory_space<vmem>>, %arg4: memref<8x6xf32, #tpu.memory_space<vmem>>, %arg5: memref<2x8x256xf32, #tpu.memory_space<vmem>>, %arg6: memref<2x8x256xf32, #tpu.memory_space<vmem>>) attributes {dimension_semantics = [#tpu.dimension_semantics<parallel>], iteration_bounds = array<i64: 1>, scalar_prefetch = 0 : i64, scratch_operands = 1 : i64, tpu.core_type = #tpu.core_type<tc>, window_params = [{transform_indices = @transform_0, window_bounds = array<i64: 2, 4, 256>}, {pipeline_mode = #tpu.pipeline_mode<synchronous>, transform_indices = @transform_1, window_bounds = array<i64: 4, 8, 4>}, {pipeline_mode = #tpu.pipeline_mode<synchronous>, transform_indices = @transform_2, window_bounds = array<i64: 4, 8, 8>}, {pipeline_mode = #tpu.pipeline_mode<synchronous>, transform_indices = @transform_3, window_bounds = array<i64: 8, 6>}, {transform_indices = @transform_4, window_bounds = array<i64: 2, 8, 256>}]} {
    %0 = tpu.iota {dimensions = array<i32: 1>} : vector<1x256xi32>
    %c16_i32 = arith.constant 16 : i32
    %c0_i32 = arith.constant 0 : i32
    %1 = arith.cmpi eq, %c16_i32, %c0_i32 : i32
    %c1_i32 = arith.constant 1 : i32
    %2 = arith.select %1, %c1_i32, %c16_i32 : i32
    %3 = vector.broadcast %2 : i32 to vector<1x256xi32>
    %4 = arith.remsi %0, %3 : vector<1x256xi32>
    %c0_i32_0 = arith.constant 0 : i32
    %5 = vector.broadcast %c0_i32_0 : i32 to vector<1x256xi32>
    %6 = arith.cmpi ne, %4, %5 : vector<1x256xi32>
    %c0_i32_1 = arith.constant 0 : i32
    %7 = vector.broadcast %c0_i32_1 : i32 to vector<1x256xi32>
    %8 = arith.cmpi slt, %4, %7 : vector<1x256xi32>
    %c0_i32_2 = arith.constant 0 : i32
    %9 = arith.cmpi slt, %2, %c0_i32_2 : i32
    %10 = vector.broadcast %9 : i1 to vector<1x256xi1>
    %11 = vector.broadcast %10 : vector<1x256xi1> to vector<1x256xi1>
    %12 = arith.xori %8, %11 : vector<1x256xi1>
    %13 = arith.andi %12, %6 : vector<1x256xi1>
    %14 = vector.broadcast %2 : i32 to vector<1x256xi32>
    %15 = arith.addi %4, %14 : vector<1x256xi32>
    %16 = arith.select %13, %15, %4 : vector<1x256xi1>, vector<1x256xi32>
    %c15_i32 = arith.constant 15 : i32
    %17 = vector.broadcast %c15_i32 : i32 to vector<1x256xi32>
    %18 = arith.cmpi eq, %16, %17 : vector<1x256xi32>
    %c240_i32 = arith.constant 240 : i32
    %19 = vector.broadcast %c240_i32 : i32 to vector<1x256xi32>
    %20 = arith.cmpi sge, %0, %19 : vector<1x256xi32>
    %21 = arith.ori %18, %20 : vector<1x256xi1>
    %c0 = arith.constant 0 : index
    %c0_3 = arith.constant 0 : index
    %22 = vector.load %arg4[%c0, %c0_3] : memref<8x6xf32, #tpu.memory_space<vmem>>, vector<8x6xf32>
    %c0_4 = arith.constant 0 : index
    %c0_5 = arith.constant 0 : index
    %c0_6 = arith.constant 0 : index
    %23 = vector.load %arg2[%c0_4, %c0_5, %c0_6] : memref<4x8x4xf32, #tpu.memory_space<vmem>>, vector<4x8x4xf32>
    %c0_7 = arith.constant 0 : index
    %c0_8 = arith.constant 0 : index
    %c0_9 = arith.constant 0 : index
    %24 = vector.load %arg3[%c0_7, %c0_8, %c0_9] : memref<4x8x8xf32, #tpu.memory_space<vmem>>, vector<4x8x8xf32>
    %c0_10 = arith.constant 0 : index
    %c0_11 = arith.constant 0 : index
    %c0_12 = arith.constant 0 : index
    %25 = vector.load %arg1[%c0_10, %c0_11, %c0_12] : memref<2x4x256xf32, #tpu.memory_space<vmem>>, vector<2x4x256xf32>
    %26 = vector.shape_cast %25 : vector<2x4x256xf32> to vector<8x256xf32>
    %27 = vector.extract_strided_slice %22 {offsets = [0, 0], sizes = [8, 1], strides = [1, 1]} : vector<8x6xf32> to vector<8x1xf32>
    %28 = vector.extract_strided_slice %22 {offsets = [0, 1], sizes = [8, 1], strides = [1, 1]} : vector<8x6xf32> to vector<8x1xf32>
    %29 = vector.extract_strided_slice %22 {offsets = [0, 2], sizes = [8, 1], strides = [1, 1]} : vector<8x6xf32> to vector<8x1xf32>
    %cst = arith.constant 0.000000e+00 : f32
    %30 = vector.broadcast %cst : f32 to vector<8x256xf32>
    %c255_i32 = arith.constant 255 : i32
    %31 = tpu.dynamic_rotate %26 by %c255_i32 dim 1 : vector<8x256xf32>, i32 -> vector<8x256xf32>
    %32 = vector.shape_cast %18 : vector<1x256xi1> to vector<1x256xi1>
    %33 = vector.broadcast %32 : vector<1x256xi1> to vector<8x256xi1>
    %34 = arith.select %33, %30, %31 : vector<8x256xi1>, vector<8x256xf32>
    %c240_i32_13 = arith.constant 240 : i32
    %35 = tpu.dynamic_rotate %26 by %c240_i32_13 dim 1 : vector<8x256xf32>, i32 -> vector<8x256xf32>
    %36 = vector.shape_cast %20 : vector<1x256xi1> to vector<1x256xi1>
    %37 = vector.broadcast %36 : vector<1x256xi1> to vector<8x256xi1>
    %38 = arith.select %37, %30, %35 : vector<8x256xi1>, vector<8x256xf32>
    %c239_i32 = arith.constant 239 : i32
    %39 = tpu.dynamic_rotate %26 by %c239_i32 dim 1 : vector<8x256xf32>, i32 -> vector<8x256xf32>
    %40 = vector.shape_cast %21 : vector<1x256xi1> to vector<1x256xi1>
    %41 = vector.broadcast %40 : vector<1x256xi1> to vector<8x256xi1>
    %42 = arith.select %41, %30, %39 : vector<8x256xi1>, vector<8x256xf32>
    %43 = vector.extract_strided_slice %23 {offsets = [0, 0, 0], sizes = [1, 8, 4], strides = [1, 1, 1]} : vector<4x8x4xf32> to vector<1x8x4xf32>
    %44 = vector.shape_cast %43 : vector<1x8x4xf32> to vector<8x4xf32>
    %45 = vector.extract_strided_slice %23 {offsets = [1, 0, 0], sizes = [1, 8, 4], strides = [1, 1, 1]} : vector<4x8x4xf32> to vector<1x8x4xf32>
    %46 = vector.shape_cast %45 : vector<1x8x4xf32> to vector<8x4xf32>
    %47 = vector.extract_strided_slice %23 {offsets = [2, 0, 0], sizes = [1, 8, 4], strides = [1, 1, 1]} : vector<4x8x4xf32> to vector<1x8x4xf32>
    %48 = vector.shape_cast %47 : vector<1x8x4xf32> to vector<8x4xf32>
    %49 = vector.extract_strided_slice %23 {offsets = [3, 0, 0], sizes = [1, 8, 4], strides = [1, 1, 1]} : vector<4x8x4xf32> to vector<1x8x4xf32>
    %50 = vector.shape_cast %49 : vector<1x8x4xf32> to vector<8x4xf32>
    %51 = vector.shape_cast %27 : vector<8x1xf32> to vector<1x8x1xf32>
    %cst_14 = arith.constant dense<0.000000e+00> : vector<1xf32>
    %52 = vector.multi_reduction <add>, %51, %cst_14 [1, 2] : vector<1x8x1xf32> to vector<1xf32>
    %53 = vector.shape_cast %52 : vector<1xf32> to vector<1x1x1xf32>
    %54 = vector.extract %53[0, 0, 0] : f32 from vector<1x1x1xf32>
    %55 = arith.mulf %27, %27 : vector<8x1xf32>
    %56 = vector.shape_cast %55 : vector<8x1xf32> to vector<1x8x1xf32>
    %cst_15 = arith.constant dense<0.000000e+00> : vector<1xf32>
    %57 = vector.multi_reduction <add>, %56, %cst_15 [1, 2] : vector<1x8x1xf32> to vector<1xf32>
    %58 = vector.shape_cast %57 : vector<1xf32> to vector<1x1x1xf32>
    %59 = vector.extract %58[0, 0, 0] : f32 from vector<1x1x1xf32>
    %60 = vector.extract_strided_slice %26 {offsets = [0, 0], sizes = [4, 256], strides = [1, 1]} : vector<8x256xf32> to vector<4x256xf32>
    %cst_16 = arith.constant dense<0.000000e+00> : vector<8x256xf32>
    %61 = tpu.matmul %44, %60, %cst_16 {dimension_numbers = #tpu.dot_dimension_numbers<[1], [0], [0], [1], [0, 0, 1, 1], [], []>} : vector<8x4xf32>, vector<4x256xf32>, vector<8x256xf32> -> vector<8x256xf32>
    %62 = vector.extract_strided_slice %34 {offsets = [0, 0], sizes = [4, 256], strides = [1, 1]} : vector<8x256xf32> to vector<4x256xf32>
    %cst_17 = arith.constant dense<0.000000e+00> : vector<8x256xf32>
    %63 = tpu.matmul %46, %62, %cst_17 {dimension_numbers = #tpu.dot_dimension_numbers<[1], [0], [0], [1], [0, 0, 1, 1], [], []>} : vector<8x4xf32>, vector<4x256xf32>, vector<8x256xf32> -> vector<8x256xf32>
    %64 = arith.addf %61, %63 : vector<8x256xf32>
    %65 = vector.extract_strided_slice %38 {offsets = [0, 0], sizes = [4, 256], strides = [1, 1]} : vector<8x256xf32> to vector<4x256xf32>
    %cst_18 = arith.constant dense<0.000000e+00> : vector<8x256xf32>
    %66 = tpu.matmul %48, %65, %cst_18 {dimension_numbers = #tpu.dot_dimension_numbers<[1], [0], [0], [1], [0, 0, 1, 1], [], []>} : vector<8x4xf32>, vector<4x256xf32>, vector<8x256xf32> -> vector<8x256xf32>
    %67 = arith.addf %64, %66 : vector<8x256xf32>
    %68 = vector.extract_strided_slice %42 {offsets = [0, 0], sizes = [4, 256], strides = [1, 1]} : vector<8x256xf32> to vector<4x256xf32>
    %cst_19 = arith.constant dense<0.000000e+00> : vector<8x256xf32>
    %69 = tpu.matmul %50, %68, %cst_19 {dimension_numbers = #tpu.dot_dimension_numbers<[1], [0], [0], [1], [0, 0, 1, 1], [], []>} : vector<8x4xf32>, vector<4x256xf32>, vector<8x256xf32> -> vector<8x256xf32>
    %70 = arith.addf %67, %69 : vector<8x256xf32>
    %cst_20 = arith.constant dense<0.000000e+00> : vector<8xf32>
    %71 = vector.multi_reduction <add>, %70, %cst_20 [1] : vector<8x256xf32> to vector<8xf32>
    %72 = vector.shape_cast %71 : vector<8xf32> to vector<8x1xf32>
    %73 = vector.shape_cast %72 : vector<8x1xf32> to vector<1x8x1xf32>
    %cst_21 = arith.constant dense<0.000000e+00> : vector<1xf32>
    %74 = vector.multi_reduction <add>, %73, %cst_21 [1, 2] : vector<1x8x1xf32> to vector<1xf32>
    %75 = vector.shape_cast %74 : vector<1xf32> to vector<1x1x1xf32>
    %76 = vector.extract %75[0, 0, 0] : f32 from vector<1x1x1xf32>
    %77 = arith.mulf %70, %70 : vector<8x256xf32>
    %78 = vector.shape_cast %77 : vector<8x256xf32> to vector<1x8x256xf32>
    %cst_22 = arith.constant dense<0.000000e+00> : vector<1xf32>
    %79 = vector.multi_reduction <add>, %78, %cst_22 [1, 2] : vector<1x8x256xf32> to vector<1xf32>
    %80 = vector.shape_cast %79 : vector<1xf32> to vector<1x1x1xf32>
    %81 = vector.extract %80[0, 0, 0] : f32 from vector<1x1x1xf32>
    %cst_23 = arith.constant 2.560000e+02 : f32
    %82 = arith.mulf %cst_23, %54 : f32
    %83 = arith.addf %76, %82 : f32
    %cst_24 = arith.constant 4.8828125E-4 : f32
    %84 = arith.mulf %83, %cst_24 : f32
    %85 = arith.mulf %27, %72 : vector<8x1xf32>
    %86 = vector.shape_cast %85 : vector<8x1xf32> to vector<1x8x1xf32>
    %cst_25 = arith.constant dense<0.000000e+00> : vector<1xf32>
    %87 = vector.multi_reduction <add>, %86, %cst_25 [1, 2] : vector<1x8x1xf32> to vector<1xf32>
    %88 = vector.shape_cast %87 : vector<1xf32> to vector<1x1x1xf32>
    %89 = vector.extract %88[0, 0, 0] : f32 from vector<1x1x1xf32>
    %cst_26 = arith.constant 2.000000e+00 : f32
    %90 = arith.mulf %cst_26, %89 : f32
    %91 = arith.addf %81, %90 : f32
    %cst_27 = arith.constant 2.560000e+02 : f32
    %92 = arith.mulf %cst_27, %59 : f32
    %93 = arith.addf %91, %92 : f32
    %cst_28 = arith.constant 4.8828125E-4 : f32
    %94 = arith.mulf %93, %cst_28 : f32
    %95 = arith.mulf %84, %84 : f32
    %96 = arith.subf %94, %95 : f32
    %cst_29 = arith.constant 0.000000e+00 : f32
    %97 = arith.maximumf %96, %cst_29 : f32
    %cst_30 = arith.constant 9.99999974E-6 : f32
    %98 = arith.addf %97, %cst_30 : f32
    %99 = math.rsqrt %98 : f32
    %100 = vector.broadcast %99 : f32 to vector<8x1xf32>
    %101 = arith.mulf %28, %100 : vector<8x1xf32>
    %102 = vector.broadcast %84 : f32 to vector<8x1xf32>
    %103 = arith.subf %27, %102 : vector<8x1xf32>
    %104 = vector.broadcast %99 : f32 to vector<8x1xf32>
    %105 = arith.mulf %28, %104 : vector<8x1xf32>
    %106 = arith.mulf %103, %105 : vector<8x1xf32>
    %107 = arith.addf %106, %29 : vector<8x1xf32>
    %108 = vector.broadcast %101 : vector<8x1xf32> to vector<8x256xf32>
    %109 = arith.mulf %70, %108 : vector<8x256xf32>
    %110 = vector.broadcast %107 : vector<8x1xf32> to vector<8x256xf32>
    %111 = arith.addf %109, %110 : vector<8x256xf32>
    %cst_31 = arith.constant 0.000000e+00 : f32
    %112 = vector.broadcast %cst_31 : f32 to vector<8x256xf32>
    %113 = arith.subf %112, %111 : vector<8x256xf32>
    %cst_32 = arith.constant 8.000000e+01 : f32
    %114 = vector.broadcast %cst_32 : f32 to vector<8x256xf32>
    %115 = arith.minimumf %113, %114 : vector<8x256xf32>
    %116 = math.exp %115 : vector<8x256xf32>
    %cst_33 = arith.constant 1.000000e+00 : f32
    %117 = vector.broadcast %cst_33 : f32 to vector<8x256xf32>
    %118 = arith.addf %117, %116 : vector<8x256xf32>
    %119 = tpu.reciprocal %118 : vector<8x256xf32> -> vector<8x256xf32>
    %120 = arith.mulf %111, %119 : vector<8x256xf32>
    %c0_34 = arith.constant 0 : index
    %c0_35 = arith.constant 0 : index
    %c0_36 = arith.constant 0 : index
    %121 = vector.load %arg6[%c0_34, %c0_35, %c0_36] : memref<2x8x256xf32, #tpu.memory_space<vmem>>, vector<1x8x256xf32>
    %122 = vector.shape_cast %121 : vector<1x8x256xf32> to vector<8x256xf32>
    %123 = vector.shape_cast %120 : vector<8x256xf32> to vector<1x8x256xf32>
    tpu.vector_store %arg6[%c0_34, %c0_35, %c0_36], %123 {strides = array<i32>} : memref<2x8x256xf32, #tpu.memory_space<vmem>>, vector<1x8x256xf32>,
    %124 = vector.extract_strided_slice %26 {offsets = [4, 0], sizes = [4, 256], strides = [1, 1]} : vector<8x256xf32> to vector<4x256xf32>
    %cst_37 = arith.constant dense<0.000000e+00> : vector<8x256xf32>
    %125 = tpu.matmul %44, %124, %cst_37 {dimension_numbers = #tpu.dot_dimension_numbers<[1], [0], [0], [1], [0, 0, 1, 1], [], []>} : vector<8x4xf32>, vector<4x256xf32>, vector<8x256xf32> -> vector<8x256xf32>
    %126 = vector.extract_strided_slice %34 {offsets = [4, 0], sizes = [4, 256], strides = [1, 1]} : vector<8x256xf32> to vector<4x256xf32>
    %cst_38 = arith.constant dense<0.000000e+00> : vector<8x256xf32>
    %127 = tpu.matmul %46, %126, %cst_38 {dimension_numbers = #tpu.dot_dimension_numbers<[1], [0], [0], [1], [0, 0, 1, 1], [], []>} : vector<8x4xf32>, vector<4x256xf32>, vector<8x256xf32> -> vector<8x256xf32>
    %128 = arith.addf %125, %127 : vector<8x256xf32>
    %129 = vector.extract_strided_slice %38 {offsets = [4, 0], sizes = [4, 256], strides = [1, 1]} : vector<8x256xf32> to vector<4x256xf32>
    %cst_39 = arith.constant dense<0.000000e+00> : vector<8x256xf32>
    %130 = tpu.matmul %48, %129, %cst_39 {dimension_numbers = #tpu.dot_dimension_numbers<[1], [0], [0], [1], [0, 0, 1, 1], [], []>} : vector<8x4xf32>, vector<4x256xf32>, vector<8x256xf32> -> vector<8x256xf32>
    %131 = arith.addf %128, %130 : vector<8x256xf32>
    %132 = vector.extract_strided_slice %42 {offsets = [4, 0], sizes = [4, 256], strides = [1, 1]} : vector<8x256xf32> to vector<4x256xf32>
    %cst_40 = arith.constant dense<0.000000e+00> : vector<8x256xf32>
    %133 = tpu.matmul %50, %132, %cst_40 {dimension_numbers = #tpu.dot_dimension_numbers<[1], [0], [0], [1], [0, 0, 1, 1], [], []>} : vector<8x4xf32>, vector<4x256xf32>, vector<8x256xf32> -> vector<8x256xf32>
    %134 = arith.addf %131, %133 : vector<8x256xf32>
    %cst_41 = arith.constant dense<0.000000e+00> : vector<8xf32>
    %135 = vector.multi_reduction <add>, %134, %cst_41 [1] : vector<8x256xf32> to vector<8xf32>
    %136 = vector.shape_cast %135 : vector<8xf32> to vector<8x1xf32>
    %137 = vector.shape_cast %136 : vector<8x1xf32> to vector<1x8x1xf32>
    %cst_42 = arith.constant dense<0.000000e+00> : vector<1xf32>
    %138 = vector.multi_reduction <add>, %137, %cst_42 [1, 2] : vector<1x8x1xf32> to vector<1xf32>
    %139 = vector.shape_cast %138 : vector<1xf32> to vector<1x1x1xf32>
    %140 = vector.extract %139[0, 0, 0] : f32 from vector<1x1x1xf32>
    %141 = arith.mulf %134, %134 : vector<8x256xf32>
    %142 = vector.shape_cast %141 : vector<8x256xf32> to vector<1x8x256xf32>
    %cst_43 = arith.constant dense<0.000000e+00> : vector<1xf32>
    %143 = vector.multi_reduction <add>, %142, %cst_43 [1, 2] : vector<1x8x256xf32> to vector<1xf32>
    %144 = vector.shape_cast %143 : vector<1xf32> to vector<1x1x1xf32>
    %145 = vector.extract %144[0, 0, 0] : f32 from vector<1x1x1xf32>
    %cst_44 = arith.constant 2.560000e+02 : f32
    %146 = arith.mulf %cst_44, %54 : f32
    %147 = arith.addf %140, %146 : f32
    %cst_45 = arith.constant 4.8828125E-4 : f32
    %148 = arith.mulf %147, %cst_45 : f32
    %149 = arith.mulf %27, %136 : vector<8x1xf32>
    %150 = vector.shape_cast %149 : vector<8x1xf32> to vector<1x8x1xf32>
    %cst_46 = arith.constant dense<0.000000e+00> : vector<1xf32>
    %151 = vector.multi_reduction <add>, %150, %cst_46 [1, 2] : vector<1x8x1xf32> to vector<1xf32>
    %152 = vector.shape_cast %151 : vector<1xf32> to vector<1x1x1xf32>
    %153 = vector.extract %152[0, 0, 0] : f32 from vector<1x1x1xf32>
    %cst_47 = arith.constant 2.000000e+00 : f32
    %154 = arith.mulf %cst_47, %153 : f32
    %155 = arith.addf %145, %154 : f32
    %cst_48 = arith.constant 2.560000e+02 : f32
    %156 = arith.mulf %cst_48, %59 : f32
    %157 = arith.addf %155, %156 : f32
    %cst_49 = arith.constant 4.8828125E-4 : f32
    %158 = arith.mulf %157, %cst_49 : f32
    %159 = arith.mulf %148, %148 : f32
    %160 = arith.subf %158, %159 : f32
    %cst_50 = arith.constant 0.000000e+00 : f32
    %161 = arith.maximumf %160, %cst_50 : f32
    %cst_51 = arith.constant 9.99999974E-6 : f32
    %162 = arith.addf %161, %cst_51 : f32
    %163 = math.rsqrt %162 : f32
    %164 = vector.broadcast %163 : f32 to vector<8x1xf32>
    %165 = arith.mulf %28, %164 : vector<8x1xf32>
    %166 = vector.broadcast %148 : f32 to vector<8x1xf32>
    %167 = arith.subf %27, %166 : vector<8x1xf32>
    %168 = vector.broadcast %163 : f32 to vector<8x1xf32>
    %169 = arith.mulf %28, %168 : vector<8x1xf32>
    %170 = arith.mulf %167, %169 : vector<8x1xf32>
    %171 = arith.addf %170, %29 : vector<8x1xf32>
    %172 = vector.broadcast %165 : vector<8x1xf32> to vector<8x256xf32>
    %173 = arith.mulf %134, %172 : vector<8x256xf32>
    %174 = vector.broadcast %171 : vector<8x1xf32> to vector<8x256xf32>
    %175 = arith.addf %173, %174 : vector<8x256xf32>
    %cst_52 = arith.constant 0.000000e+00 : f32
    %176 = vector.broadcast %cst_52 : f32 to vector<8x256xf32>
    %177 = arith.subf %176, %175 : vector<8x256xf32>
    %cst_53 = arith.constant 8.000000e+01 : f32
    %178 = vector.broadcast %cst_53 : f32 to vector<8x256xf32>
    %179 = arith.minimumf %177, %178 : vector<8x256xf32>
    %180 = math.exp %179 : vector<8x256xf32>
    %cst_54 = arith.constant 1.000000e+00 : f32
    %181 = vector.broadcast %cst_54 : f32 to vector<8x256xf32>
    %182 = arith.addf %181, %180 : vector<8x256xf32>
    %183 = tpu.reciprocal %182 : vector<8x256xf32> -> vector<8x256xf32>
    %184 = arith.mulf %175, %183 : vector<8x256xf32>
    %c1 = arith.constant 1 : index
    %c0_55 = arith.constant 0 : index
    %c0_56 = arith.constant 0 : index
    %185 = vector.load %arg6[%c1, %c0_55, %c0_56] : memref<2x8x256xf32, #tpu.memory_space<vmem>>, vector<1x8x256xf32>
    %186 = vector.shape_cast %185 : vector<1x8x256xf32> to vector<8x256xf32>
    %187 = vector.shape_cast %184 : vector<8x256xf32> to vector<1x8x256xf32>
    tpu.vector_store %arg6[%c1, %c0_55, %c0_56], %187 {strides = array<i32>} : memref<2x8x256xf32, #tpu.memory_space<vmem>>, vector<1x8x256xf32>,
    %c0_57 = arith.constant 0 : index
    %c0_58 = arith.constant 0 : index
    %c0_59 = arith.constant 0 : index
    %188 = vector.load %arg6[%c0_57, %c0_58, %c0_59] : memref<2x8x256xf32, #tpu.memory_space<vmem>>, vector<2x8x256xf32>
    %189 = vector.shape_cast %188 : vector<2x8x256xf32> to vector<16x256xf32>
    %190 = vector.extract_strided_slice %22 {offsets = [0, 3], sizes = [8, 1], strides = [1, 1]} : vector<8x6xf32> to vector<8x1xf32>
    %191 = vector.extract_strided_slice %22 {offsets = [0, 4], sizes = [8, 1], strides = [1, 1]} : vector<8x6xf32> to vector<8x1xf32>
    %192 = vector.extract_strided_slice %22 {offsets = [0, 5], sizes = [8, 1], strides = [1, 1]} : vector<8x6xf32> to vector<8x1xf32>
    %cst_60 = arith.constant 0.000000e+00 : f32
    %193 = vector.broadcast %cst_60 : f32 to vector<16x256xf32>
    %c255_i32_61 = arith.constant 255 : i32
    %194 = tpu.dynamic_rotate %189 by %c255_i32_61 dim 1 : vector<16x256xf32>, i32 -> vector<16x256xf32>
    %195 = vector.shape_cast %18 : vector<1x256xi1> to vector<1x256xi1>
    %196 = vector.broadcast %195 : vector<1x256xi1> to vector<16x256xi1>
    %197 = arith.select %196, %193, %194 : vector<16x256xi1>, vector<16x256xf32>
    %c240_i32_62 = arith.constant 240 : i32
    %198 = tpu.dynamic_rotate %189 by %c240_i32_62 dim 1 : vector<16x256xf32>, i32 -> vector<16x256xf32>
    %199 = vector.shape_cast %20 : vector<1x256xi1> to vector<1x256xi1>
    %200 = vector.broadcast %199 : vector<1x256xi1> to vector<16x256xi1>
    %201 = arith.select %200, %193, %198 : vector<16x256xi1>, vector<16x256xf32>
    %c239_i32_63 = arith.constant 239 : i32
    %202 = tpu.dynamic_rotate %189 by %c239_i32_63 dim 1 : vector<16x256xf32>, i32 -> vector<16x256xf32>
    %203 = vector.shape_cast %21 : vector<1x256xi1> to vector<1x256xi1>
    %204 = vector.broadcast %203 : vector<1x256xi1> to vector<16x256xi1>
    %205 = arith.select %204, %193, %202 : vector<16x256xi1>, vector<16x256xf32>
    %206 = vector.extract_strided_slice %24 {offsets = [0, 0, 0], sizes = [1, 8, 8], strides = [1, 1, 1]} : vector<4x8x8xf32> to vector<1x8x8xf32>
    %207 = vector.shape_cast %206 : vector<1x8x8xf32> to vector<8x8xf32>
    %208 = vector.extract_strided_slice %24 {offsets = [1, 0, 0], sizes = [1, 8, 8], strides = [1, 1, 1]} : vector<4x8x8xf32> to vector<1x8x8xf32>
    %209 = vector.shape_cast %208 : vector<1x8x8xf32> to vector<8x8xf32>
    %210 = vector.extract_strided_slice %24 {offsets = [2, 0, 0], sizes = [1, 8, 8], strides = [1, 1, 1]} : vector<4x8x8xf32> to vector<1x8x8xf32>
    %211 = vector.shape_cast %210 : vector<1x8x8xf32> to vector<8x8xf32>
    %212 = vector.extract_strided_slice %24 {offsets = [3, 0, 0], sizes = [1, 8, 8], strides = [1, 1, 1]} : vector<4x8x8xf32> to vector<1x8x8xf32>
    %213 = vector.shape_cast %212 : vector<1x8x8xf32> to vector<8x8xf32>
    %214 = vector.shape_cast %190 : vector<8x1xf32> to vector<1x8x1xf32>
    %cst_64 = arith.constant dense<0.000000e+00> : vector<1xf32>
    %215 = vector.multi_reduction <add>, %214, %cst_64 [1, 2] : vector<1x8x1xf32> to vector<1xf32>
    %216 = vector.shape_cast %215 : vector<1xf32> to vector<1x1x1xf32>
    %217 = vector.extract %216[0, 0, 0] : f32 from vector<1x1x1xf32>
    %218 = arith.mulf %190, %190 : vector<8x1xf32>
    %219 = vector.shape_cast %218 : vector<8x1xf32> to vector<1x8x1xf32>
    %cst_65 = arith.constant dense<0.000000e+00> : vector<1xf32>
    %220 = vector.multi_reduction <add>, %219, %cst_65 [1, 2] : vector<1x8x1xf32> to vector<1xf32>
    %221 = vector.shape_cast %220 : vector<1xf32> to vector<1x1x1xf32>
    %222 = vector.extract %221[0, 0, 0] : f32 from vector<1x1x1xf32>
    %223 = vector.extract_strided_slice %189 {offsets = [0, 0], sizes = [8, 256], strides = [1, 1]} : vector<16x256xf32> to vector<8x256xf32>
    %cst_66 = arith.constant dense<0.000000e+00> : vector<8x256xf32>
    %224 = tpu.matmul %207, %223, %cst_66 {dimension_numbers = #tpu.dot_dimension_numbers<[1], [0], [0], [1], [0, 0, 1, 1], [], []>} : vector<8x8xf32>, vector<8x256xf32>, vector<8x256xf32> -> vector<8x256xf32>
    %225 = vector.extract_strided_slice %197 {offsets = [0, 0], sizes = [8, 256], strides = [1, 1]} : vector<16x256xf32> to vector<8x256xf32>
    %cst_67 = arith.constant dense<0.000000e+00> : vector<8x256xf32>
    %226 = tpu.matmul %209, %225, %cst_67 {dimension_numbers = #tpu.dot_dimension_numbers<[1], [0], [0], [1], [0, 0, 1, 1], [], []>} : vector<8x8xf32>, vector<8x256xf32>, vector<8x256xf32> -> vector<8x256xf32>
    %227 = arith.addf %224, %226 : vector<8x256xf32>
    %228 = vector.extract_strided_slice %201 {offsets = [0, 0], sizes = [8, 256], strides = [1, 1]} : vector<16x256xf32> to vector<8x256xf32>
    %cst_68 = arith.constant dense<0.000000e+00> : vector<8x256xf32>
    %229 = tpu.matmul %211, %228, %cst_68 {dimension_numbers = #tpu.dot_dimension_numbers<[1], [0], [0], [1], [0, 0, 1, 1], [], []>} : vector<8x8xf32>, vector<8x256xf32>, vector<8x256xf32> -> vector<8x256xf32>
    %230 = arith.addf %227, %229 : vector<8x256xf32>
    %231 = vector.extract_strided_slice %205 {offsets = [0, 0], sizes = [8, 256], strides = [1, 1]} : vector<16x256xf32> to vector<8x256xf32>
    %cst_69 = arith.constant dense<0.000000e+00> : vector<8x256xf32>
    %232 = tpu.matmul %213, %231, %cst_69 {dimension_numbers = #tpu.dot_dimension_numbers<[1], [0], [0], [1], [0, 0, 1, 1], [], []>} : vector<8x8xf32>, vector<8x256xf32>, vector<8x256xf32> -> vector<8x256xf32>
    %233 = arith.addf %230, %232 : vector<8x256xf32>
    %cst_70 = arith.constant dense<0.000000e+00> : vector<8xf32>
    %234 = vector.multi_reduction <add>, %233, %cst_70 [1] : vector<8x256xf32> to vector<8xf32>
    %235 = vector.shape_cast %234 : vector<8xf32> to vector<8x1xf32>
    %236 = vector.shape_cast %235 : vector<8x1xf32> to vector<1x8x1xf32>
    %cst_71 = arith.constant dense<0.000000e+00> : vector<1xf32>
    %237 = vector.multi_reduction <add>, %236, %cst_71 [1, 2] : vector<1x8x1xf32> to vector<1xf32>
    %238 = vector.shape_cast %237 : vector<1xf32> to vector<1x1x1xf32>
    %239 = vector.extract %238[0, 0, 0] : f32 from vector<1x1x1xf32>
    %240 = arith.mulf %233, %233 : vector<8x256xf32>
    %241 = vector.shape_cast %240 : vector<8x256xf32> to vector<1x8x256xf32>
    %cst_72 = arith.constant dense<0.000000e+00> : vector<1xf32>
    %242 = vector.multi_reduction <add>, %241, %cst_72 [1, 2] : vector<1x8x256xf32> to vector<1xf32>
    %243 = vector.shape_cast %242 : vector<1xf32> to vector<1x1x1xf32>
    %244 = vector.extract %243[0, 0, 0] : f32 from vector<1x1x1xf32>
    %cst_73 = arith.constant 2.560000e+02 : f32
    %245 = arith.mulf %cst_73, %217 : f32
    %246 = arith.addf %239, %245 : f32
    %cst_74 = arith.constant 4.8828125E-4 : f32
    %247 = arith.mulf %246, %cst_74 : f32
    %248 = arith.mulf %190, %235 : vector<8x1xf32>
    %249 = vector.shape_cast %248 : vector<8x1xf32> to vector<1x8x1xf32>
    %cst_75 = arith.constant dense<0.000000e+00> : vector<1xf32>
    %250 = vector.multi_reduction <add>, %249, %cst_75 [1, 2] : vector<1x8x1xf32> to vector<1xf32>
    %251 = vector.shape_cast %250 : vector<1xf32> to vector<1x1x1xf32>
    %252 = vector.extract %251[0, 0, 0] : f32 from vector<1x1x1xf32>
    %cst_76 = arith.constant 2.000000e+00 : f32
    %253 = arith.mulf %cst_76, %252 : f32
    %254 = arith.addf %244, %253 : f32
    %cst_77 = arith.constant 2.560000e+02 : f32
    %255 = arith.mulf %cst_77, %222 : f32
    %256 = arith.addf %254, %255 : f32
    %cst_78 = arith.constant 4.8828125E-4 : f32
    %257 = arith.mulf %256, %cst_78 : f32
    %258 = arith.mulf %247, %247 : f32
    %259 = arith.subf %257, %258 : f32
    %cst_79 = arith.constant 0.000000e+00 : f32
    %260 = arith.maximumf %259, %cst_79 : f32
    %cst_80 = arith.constant 9.99999974E-6 : f32
    %261 = arith.addf %260, %cst_80 : f32
    %262 = math.rsqrt %261 : f32
    %263 = vector.broadcast %262 : f32 to vector<8x1xf32>
    %264 = arith.mulf %191, %263 : vector<8x1xf32>
    %265 = vector.broadcast %247 : f32 to vector<8x1xf32>
    %266 = arith.subf %190, %265 : vector<8x1xf32>
    %267 = vector.broadcast %262 : f32 to vector<8x1xf32>
    %268 = arith.mulf %191, %267 : vector<8x1xf32>
    %269 = arith.mulf %266, %268 : vector<8x1xf32>
    %270 = arith.addf %269, %192 : vector<8x1xf32>
    %271 = vector.broadcast %264 : vector<8x1xf32> to vector<8x256xf32>
    %272 = arith.mulf %233, %271 : vector<8x256xf32>
    %273 = vector.broadcast %270 : vector<8x1xf32> to vector<8x256xf32>
    %274 = arith.addf %272, %273 : vector<8x256xf32>
    %cst_81 = arith.constant 0.000000e+00 : f32
    %275 = vector.broadcast %cst_81 : f32 to vector<8x256xf32>
    %276 = arith.subf %275, %274 : vector<8x256xf32>
    %cst_82 = arith.constant 8.000000e+01 : f32
    %277 = vector.broadcast %cst_82 : f32 to vector<8x256xf32>
    %278 = arith.minimumf %276, %277 : vector<8x256xf32>
    %279 = math.exp %278 : vector<8x256xf32>
    %cst_83 = arith.constant 1.000000e+00 : f32
    %280 = vector.broadcast %cst_83 : f32 to vector<8x256xf32>
    %281 = arith.addf %280, %279 : vector<8x256xf32>
    %282 = tpu.reciprocal %281 : vector<8x256xf32> -> vector<8x256xf32>
    %283 = arith.mulf %274, %282 : vector<8x256xf32>
    %c0_84 = arith.constant 0 : index
    %c0_85 = arith.constant 0 : index
    %c0_86 = arith.constant 0 : index
    %284 = vector.load %arg5[%c0_84, %c0_85, %c0_86] : memref<2x8x256xf32, #tpu.memory_space<vmem>>, vector<1x8x256xf32>
    %285 = vector.shape_cast %284 : vector<1x8x256xf32> to vector<8x256xf32>
    %286 = vector.shape_cast %283 : vector<8x256xf32> to vector<1x8x256xf32>
    tpu.vector_store %arg5[%c0_84, %c0_85, %c0_86], %286 {strides = array<i32>} : memref<2x8x256xf32, #tpu.memory_space<vmem>>, vector<1x8x256xf32>,
    %287 = vector.extract_strided_slice %189 {offsets = [8, 0], sizes = [8, 256], strides = [1, 1]} : vector<16x256xf32> to vector<8x256xf32>
    %cst_87 = arith.constant dense<0.000000e+00> : vector<8x256xf32>
    %288 = tpu.matmul %207, %287, %cst_87 {dimension_numbers = #tpu.dot_dimension_numbers<[1], [0], [0], [1], [0, 0, 1, 1], [], []>} : vector<8x8xf32>, vector<8x256xf32>, vector<8x256xf32> -> vector<8x256xf32>
    %289 = vector.extract_strided_slice %197 {offsets = [8, 0], sizes = [8, 256], strides = [1, 1]} : vector<16x256xf32> to vector<8x256xf32>
    %cst_88 = arith.constant dense<0.000000e+00> : vector<8x256xf32>
    %290 = tpu.matmul %209, %289, %cst_88 {dimension_numbers = #tpu.dot_dimension_numbers<[1], [0], [0], [1], [0, 0, 1, 1], [], []>} : vector<8x8xf32>, vector<8x256xf32>, vector<8x256xf32> -> vector<8x256xf32>
    %291 = arith.addf %288, %290 : vector<8x256xf32>
    %292 = vector.extract_strided_slice %201 {offsets = [8, 0], sizes = [8, 256], strides = [1, 1]} : vector<16x256xf32> to vector<8x256xf32>
    %cst_89 = arith.constant dense<0.000000e+00> : vector<8x256xf32>
    %293 = tpu.matmul %211, %292, %cst_89 {dimension_numbers = #tpu.dot_dimension_numbers<[1], [0], [0], [1], [0, 0, 1, 1], [], []>} : vector<8x8xf32>, vector<8x256xf32>, vector<8x256xf32> -> vector<8x256xf32>
    %294 = arith.addf %291, %293 : vector<8x256xf32>
    %295 = vector.extract_strided_slice %205 {offsets = [8, 0], sizes = [8, 256], strides = [1, 1]} : vector<16x256xf32> to vector<8x256xf32>
    %cst_90 = arith.constant dense<0.000000e+00> : vector<8x256xf32>
    %296 = tpu.matmul %213, %295, %cst_90 {dimension_numbers = #tpu.dot_dimension_numbers<[1], [0], [0], [1], [0, 0, 1, 1], [], []>} : vector<8x8xf32>, vector<8x256xf32>, vector<8x256xf32> -> vector<8x256xf32>
    %297 = arith.addf %294, %296 : vector<8x256xf32>
    %cst_91 = arith.constant dense<0.000000e+00> : vector<8xf32>
    %298 = vector.multi_reduction <add>, %297, %cst_91 [1] : vector<8x256xf32> to vector<8xf32>
    %299 = vector.shape_cast %298 : vector<8xf32> to vector<8x1xf32>
    %300 = vector.shape_cast %299 : vector<8x1xf32> to vector<1x8x1xf32>
    %cst_92 = arith.constant dense<0.000000e+00> : vector<1xf32>
    %301 = vector.multi_reduction <add>, %300, %cst_92 [1, 2] : vector<1x8x1xf32> to vector<1xf32>
    %302 = vector.shape_cast %301 : vector<1xf32> to vector<1x1x1xf32>
    %303 = vector.extract %302[0, 0, 0] : f32 from vector<1x1x1xf32>
    %304 = arith.mulf %297, %297 : vector<8x256xf32>
    %305 = vector.shape_cast %304 : vector<8x256xf32> to vector<1x8x256xf32>
    %cst_93 = arith.constant dense<0.000000e+00> : vector<1xf32>
    %306 = vector.multi_reduction <add>, %305, %cst_93 [1, 2] : vector<1x8x256xf32> to vector<1xf32>
    %307 = vector.shape_cast %306 : vector<1xf32> to vector<1x1x1xf32>
    %308 = vector.extract %307[0, 0, 0] : f32 from vector<1x1x1xf32>
    %cst_94 = arith.constant 2.560000e+02 : f32
    %309 = arith.mulf %cst_94, %217 : f32
    %310 = arith.addf %303, %309 : f32
    %cst_95 = arith.constant 4.8828125E-4 : f32
    %311 = arith.mulf %310, %cst_95 : f32
    %312 = arith.mulf %190, %299 : vector<8x1xf32>
    %313 = vector.shape_cast %312 : vector<8x1xf32> to vector<1x8x1xf32>
    %cst_96 = arith.constant dense<0.000000e+00> : vector<1xf32>
    %314 = vector.multi_reduction <add>, %313, %cst_96 [1, 2] : vector<1x8x1xf32> to vector<1xf32>
    %315 = vector.shape_cast %314 : vector<1xf32> to vector<1x1x1xf32>
    %316 = vector.extract %315[0, 0, 0] : f32 from vector<1x1x1xf32>
    %cst_97 = arith.constant 2.000000e+00 : f32
    %317 = arith.mulf %cst_97, %316 : f32
    %318 = arith.addf %308, %317 : f32
    %cst_98 = arith.constant 2.560000e+02 : f32
    %319 = arith.mulf %cst_98, %222 : f32
    %320 = arith.addf %318, %319 : f32
    %cst_99 = arith.constant 4.8828125E-4 : f32
    %321 = arith.mulf %320, %cst_99 : f32
    %322 = arith.mulf %311, %311 : f32
    %323 = arith.subf %321, %322 : f32
    %cst_100 = arith.constant 0.000000e+00 : f32
    %324 = arith.maximumf %323, %cst_100 : f32
    %cst_101 = arith.constant 9.99999974E-6 : f32
    %325 = arith.addf %324, %cst_101 : f32
    %326 = math.rsqrt %325 : f32
    %327 = vector.broadcast %326 : f32 to vector<8x1xf32>
    %328 = arith.mulf %191, %327 : vector<8x1xf32>
    %329 = vector.broadcast %311 : f32 to vector<8x1xf32>
    %330 = arith.subf %190, %329 : vector<8x1xf32>
    %331 = vector.broadcast %326 : f32 to vector<8x1xf32>
    %332 = arith.mulf %191, %331 : vector<8x1xf32>
    %333 = arith.mulf %330, %332 : vector<8x1xf32>
    %334 = arith.addf %333, %192 : vector<8x1xf32>
    %335 = vector.broadcast %328 : vector<8x1xf32> to vector<8x256xf32>
    %336 = arith.mulf %297, %335 : vector<8x256xf32>
    %337 = vector.broadcast %334 : vector<8x1xf32> to vector<8x256xf32>
    %338 = arith.addf %336, %337 : vector<8x256xf32>
    %cst_102 = arith.constant 0.000000e+00 : f32
    %339 = vector.broadcast %cst_102 : f32 to vector<8x256xf32>
    %340 = arith.subf %339, %338 : vector<8x256xf32>
    %cst_103 = arith.constant 8.000000e+01 : f32
    %341 = vector.broadcast %cst_103 : f32 to vector<8x256xf32>
    %342 = arith.minimumf %340, %341 : vector<8x256xf32>
    %343 = math.exp %342 : vector<8x256xf32>
    %cst_104 = arith.constant 1.000000e+00 : f32
    %344 = vector.broadcast %cst_104 : f32 to vector<8x256xf32>
    %345 = arith.addf %344, %343 : vector<8x256xf32>
    %346 = tpu.reciprocal %345 : vector<8x256xf32> -> vector<8x256xf32>
    %347 = arith.mulf %338, %346 : vector<8x256xf32>
    %c1_105 = arith.constant 1 : index
    %c0_106 = arith.constant 0 : index
    %c0_107 = arith.constant 0 : index
    %348 = vector.load %arg5[%c1_105, %c0_106, %c0_107] : memref<2x8x256xf32, #tpu.memory_space<vmem>>, vector<1x8x256xf32>
    %349 = vector.shape_cast %348 : vector<1x8x256xf32> to vector<8x256xf32>
    %350 = vector.shape_cast %347 : vector<8x256xf32> to vector<1x8x256xf32>
    tpu.vector_store %arg5[%c1_105, %c0_106, %c0_107], %350 {strides = array<i32>} : memref<2x8x256xf32, #tpu.memory_space<vmem>>, vector<1x8x256xf32>,
    return
  }
  func.func @transform_0(%arg0: i32) -> (i32, i32, i32) {
    %c0_i32 = arith.constant 0 : i32
    %c0_i32_0 = arith.constant 0 : i32
    %c0_i32_1 = arith.constant 0 : i32
    return %arg0, %c0_i32, %c0_i32_0 : i32, i32, i32
  }
  func.func @transform_1(%arg0: i32) -> (i32, i32, i32) {
    %c0_i32 = arith.constant 0 : i32
    %c0_i32_0 = arith.constant 0 : i32
    %c0_i32_1 = arith.constant 0 : i32
    %c0_i32_2 = arith.constant 0 : i32
    return %c0_i32, %c0_i32_0, %c0_i32_1 : i32, i32, i32
  }
  func.func @transform_2(%arg0: i32) -> (i32, i32, i32) {
    %c0_i32 = arith.constant 0 : i32
    %c0_i32_0 = arith.constant 0 : i32
    %c0_i32_1 = arith.constant 0 : i32
    %c0_i32_2 = arith.constant 0 : i32
    return %c0_i32, %c0_i32_0, %c0_i32_1 : i32, i32, i32
  }
  func.func @transform_3(%arg0: i32) -> (i32, i32) {
    %c0_i32 = arith.constant 0 : i32
    %c0_i32_0 = arith.constant 0 : i32
    %c0_i32_1 = arith.constant 0 : i32
    return %c0_i32, %c0_i32_0 : i32, i32
  }
  func.func @transform_4(%arg0: i32) -> (i32, i32, i32) {
    %c0_i32 = arith.constant 0 : i32
    %c0_i32_0 = arith.constant 0 : i32
    %c0_i32_1 = arith.constant 0 : i32
    return %arg0, %c0_i32, %c0_i32_0 : i32, i32, i32
  }
}

</mosaic_0001>

<llo_original>
// kernel: unet_conv_block.1
$region0: #{unet_conv_block.1}
  #allocation0 [shape = 'u32[]', space=smem, size = 0x4, offset = 0x4, fixed_abs, tag = 'smem constant byte address 0x4 - core index']
  #allocation1 [shape = 'u32[72,128]{1,0:T(1,128)}', space=vmem, size = 0x9000, scoped, tag = 'internal scratch']
  #allocation2 [shape = 'f32[2,8,256]{2,1,0:T(8,128)}', space=vmem, size = 0x4000, scoped, tag = 'scratch operand']
  %s0 = inlined_call_operand.vmem [shape: f32[2,4,256], index: 0, kind: input, shape index: {}]
  %s1 = inlined_call_operand.vmem [shape: f32[4,8,4], index: 1, kind: input, shape index: {}]
  %s2 = inlined_call_operand.vmem [shape: f32[4,8,8], index: 2, kind: input, shape index: {}]
  %s3 = inlined_call_operand.vmem [shape: f32[8,6], index: 3, kind: input, shape index: {}]
  %s4 = inlined_call_operand.vmem [shape: f32[2,8,256], index: 4, kind: output, shape index: {}]
  %s5 = sld [smem:[#allocation0]]
  $region26: #{unet_conv_block.1} parent=0
    _
  %s7 = ssub.s32 1, %s5
  %s8 = scalar_select 0, %s7, %s5
  // Predicated region
  $region2: #{unet_conv_block.1} parent=0 // pred_check
    _
  $region3: #{unet_conv_block.1} parent=0 // pred_check_branch
    %10 = sbr.rel (0) target = $region5
  $region4: #{unet_conv_block.1} parent=0 // pred_region
    _
  $region5: #{unet_conv_block.1} parent=0 // pred_fallthru
    _
  // Predicated region
  $region6: #{unet_conv_block.1} parent=0 // pred_check
    _
  $region7: #{unet_conv_block.1} parent=0 // pred_check_branch
    %12 = sbr.rel (0) target = $region9
  $region8: #{unet_conv_block.1} parent=0 // pred_region
    _
  $region9: #{unet_conv_block.1} parent=0 // pred_fallthru
    _
  // Predicated region
  $region10: #{unet_conv_block.1} parent=0 // pred_check
    _
  $region11: #{unet_conv_block.1} parent=0 // pred_check_branch
    %14 = sbr.rel (0) target = $region13
  $region12: #{unet_conv_block.1} parent=0 // pred_region
    _
  $region13: #{unet_conv_block.1} parent=0 // pred_fallthru
    _
  // Predicated region
  $region14: #{unet_conv_block.1} parent=0 // pred_check
    _
  $region15: #{unet_conv_block.1} parent=0 // pred_check_branch
    %16 = sbr.rel (0) target = $region17
  $region16: #{unet_conv_block.1} parent=0 // pred_region
    _
  $region17: #{unet_conv_block.1} parent=0 // pred_fallthru
    _
  %v17 = vlaneseq
  %v18 = vand.u32 %v17, 127
  %v19 = vadd.s32 %v18, 128
  %vm20 = vcmp.lt.s32.totalorder %v18, 0
  %v21 = vsub.s32 0, %v18
  %v22 = vsel %vm20, %v21, %v18
  %v23 = vshrl.u32 %v22, 4
  %v24 = vand.u32 %v22, 15
  %v25 = vsub.s32 0, %v24
  %v26 = vsel %vm20, %v25, %v24
  %vm27 = vcmp.lt.s32.totalorder %v19, 0
  %v28 = vsub.s32 0, %v19
  %v29 = vsel %vm27, %v28, %v19
  %v30 = vshrl.u32 %v29, 4
  %v31 = vand.u32 %v29, 15
  %v32 = vsub.s32 0, %v31
  %v33 = vsel %vm27, %v32, %v31
  %vm34 = vcmp.ne.s32.totalorder %v26, 0
  %vm35 = vcmp.ne.s32.totalorder %v33, 0
  %vm36 = vcmp.lt.s32.totalorder %v26, 0
  %vm37 = vcmp.lt.s32.totalorder %v33, 0
  %vm38 = vmand %vm36, %vm34
  %vm39 = vmand %vm37, %vm35
  %v40 = vadd.s32 %v26, 16
  %v41 = vadd.s32 %v33, 16
  %v42 = vsel %vm38, %v40, %v26
  %v43 = vsel %vm39, %v41, %v33
  %vm44 = vcmp.eq.s32.totalorder %v42, 15
  %vm45 = vcmp.eq.s32.totalorder %v43, 15
  %vm46 = vcmp.ge.s32.totalorder %v18, 240
  %vm47 = vcmp.ge.s32.totalorder %v19, 240
  %vm48 = vmor %vm44, %vm46
  %vm49 = vmor %vm45, %vm47
  %v50 = vld [vmem:[%s3] sm:$0xff]
  %v51 = vld [vmem:[%s1] sm:$0xff]
  %v52 = vld [vmem:[%s1 + $0x8] sm:$0xff]
  %v53 = vld [vmem:[%s1 + $0x10] sm:$0xff]
  %v54 = vld [vmem:[%s1 + $0x18] sm:$0xff]
  %v55 = vld [vmem:[%s2] sm:$0xff]
  %v56 = vld [vmem:[%s2 + $0x8] sm:$0xff]
  %v57 = vld [vmem:[%s2 + $0x10] sm:$0xff]
  %v58 = vld [vmem:[%s2 + $0x18] sm:$0xff]
  %v59 = vld [vmem:[%s0] sm:$0xff]
  %v60 = vld [vmem:[%s0 + $0x8] sm:$0xff]
  %63 = vst [vmem:[#allocation1] ss:$2 sm:$0xff] %v59
  %s64 = scalar_lea.vmem [#allocation1], 1
  %65 = vst [vmem:[%s64] ss:$2 sm:$0xff] %v60
  %v66 = vld.sshfl [vmem:[#allocation1] sm:$0xff pattern:$0x75316420]
  %v67 = vld.sshfl [vmem:[#allocation1 + $0x8] sm:$0xff pattern:$0x75316420]
  %70 = vrot.lane.b32.xlu0 %v66, 127
  %v71 = vpop.permute.xlu0 %70
  %72 = vrot.lane.b32.xlu0 %v67, 127
  %v73 = vpop.permute.xlu0 %72
  %vm74 = vcmp.lt.s32.totalorder %v18, 127
  %v75 = vsel %vm74, %v71, %v73
  %v76 = vsel %vm74, %v73, %v71
  %v77 = vsel %vm44, 1, 0
  %v78 = vsel %vm45, 1, 0
  %vm79 = vcmp.eq.s32.totalorder %v77, 1
  %vm80 = vcmp.eq.s32.totalorder %v78, 1
  %v81 = vsel %vm79, 0.0, %v75
  %v82 = vsel %vm80, 0.0, %v76
  %83 = vst [vmem:[#allocation1] ss:$2 sm:$0xff] %v59
  %s84 = scalar_lea.vmem [#allocation1], 1
  %85 = vst [vmem:[%s84] ss:$2 sm:$0xff] %v60
  %v86 = vld.sshfl [vmem:[#allocation1] sm:$0xff pattern:$0x75316420]
  %v87 = vld.sshfl [vmem:[#allocation1 + $0x8] sm:$0xff pattern:$0x75316420]
  %90 = vrot.lane.b32.xlu0 %v86, 112
  %v91 = vpop.permute.xlu0 %90
  %92 = vrot.lane.b32.xlu0 %v87, 112
  %v93 = vpop.permute.xlu0 %92
  %vm94 = vcmp.lt.s32.totalorder %v18, 112
  %v95 = vsel %vm94, %v91, %v93
  %v96 = vsel %vm94, %v93, %v91
  %v97 = vsel %vm46, 1, 0
  %v98 = vsel %vm47, 1, 0
  %vm99 = vcmp.eq.s32.totalorder %v97, 1
  %vm100 = vcmp.eq.s32.totalorder %v98, 1
  %v101 = vsel %vm99, 0.0, %v95
  %v102 = vsel %vm100, 0.0, %v96
  %103 = vst [vmem:[#allocation1] ss:$2 sm:$0xff] %v59
  %s104 = scalar_lea.vmem [#allocation1], 1
  %105 = vst [vmem:[%s104] ss:$2 sm:$0xff] %v60
  %v106 = vld.sshfl [vmem:[#allocation1] sm:$0xff pattern:$0x75316420]
  %v107 = vld.sshfl [vmem:[#allocation1 + $0x8] sm:$0xff pattern:$0x75316420]
  %110 = vrot.lane.b32.xlu0 %v106, 111
  %v111 = vpop.permute.xlu0 %110
  %112 = vrot.lane.b32.xlu0 %v107, 111
  %v113 = vpop.permute.xlu0 %112
  %vm114 = vcmp.lt.s32.totalorder %v18, 111
  %v115 = vsel %vm114, %v111, %v113
  %v116 = vsel %vm114, %v113, %v111
  %v117 = vsel %vm48, 1, 0
  %v118 = vsel %vm49, 1, 0
  %vm119 = vcmp.eq.s32.totalorder %v117, 1
  %vm120 = vcmp.eq.s32.totalorder %v118, 1
  %v121 = vsel %vm119, 0.0, %v115
  %v122 = vsel %vm120, 0.0, %v116
  %vm123 = vcmask 7168
  %v124 = vsel %vm123, %v50, 0.0
  %125 = vadd.xlane.f32.xlu0 %v124
  %v126 = vpop.xlane.xlu0 %125
  %v127 = vrot.slane %v126, 4
  %v128 = vadd.f32 %v126, %v127
  %v129 = vrot.slane %v128, 2
  %v130 = vadd.f32 %v128, %v129
  %v131 = vrot.slane %v130, 1
  %v132 = vadd.f32 %v130, %v131
  %s133 = vtos %v132
  %v134 = vmul.f32 %v50, %v50
  %v135 = vsel %vm123, %v134, 0.0
  %136 = vadd.xlane.f32.xlu0 %v135
  %v137 = vpop.xlane.xlu0 %136
  %v138 = vrot.slane %v137, 4
  %v139 = vadd.f32 %v137, %v138
  %v140 = vrot.slane %v139, 2
  %v141 = vadd.f32 %v139, %v140
  %v142 = vrot.slane %v141, 1
  %v143 = vadd.f32 %v141, %v142
  %s144 = vtos %v143
  %vm145 = vcmask 31744
  %v147 = vsel %vm145, %v52, 0
  %vm149 = vcmask 1043456
  %v151 = vsel %vm149, %v81, 0
  %v154 = vsel %vm149, %v82, 0
  %156 = vmatpush.msra.mxu0 0.0
  %157 = vmatpush.msra.mxu0 0.0
  %158 = vmatpush.msra.mxu0 0.0
  %159 = vmatpush.msra.mxu0 0.0
  %160 = vmatpush.msra.mxu0 0.0
  %161 = vmatpush.msra.mxu0 0.0
  %162 = vmatpush.msra.mxu0 0.0
  %163 = vmatpush.msra.mxu0 0.0
  %164 = vmatpush.msra.mxu0 0.0
  %165 = vmatpush.msra.mxu0 0.0
  %166 = vmatpush.msra.mxu0 0.0
  %167 = vmatpush.msra.mxu0 0.0
  %168 = vmatpush.msra.mxu0 0.0
  %169 = vmatpush.msra.mxu0 0.0
  %170 = vmatpush.msra.mxu0 0.0
  %171 = vmatpush.msra.mxu0 %v151
  %172 = vmatmul.f32.gmra.mxu0 %v147
  %v173 = vpop.f32.mrf.mxu0
  %v174 = vadd.f32 0.0, %v173
  %175 = vdwg.mxu0
  %176 = vmatpush.msra.mxu0 0.0
  %177 = vmatpush.msra.mxu0 0.0
  %178 = vmatpush.msra.mxu0 0.0
  %179 = vmatpush.msra.mxu0 0.0
  %180 = vmatpush.msra.mxu0 0.0
  %181 = vmatpush.msra.mxu0 0.0
  %182 = vmatpush.msra.mxu0 0.0
  %183 = vmatpush.msra.mxu0 0.0
  %184 = vmatpush.msra.mxu0 0.0
  %185 = vmatpush.msra.mxu0 0.0
  %186 = vmatpush.msra.mxu0 0.0
  %187 = vmatpush.msra.mxu0 0.0
  %188 = vmatpush.msra.mxu0 0.0
  %189 = vmatpush.msra.mxu0 0.0
  %190 = vmatpush.msra.mxu0 0.0
  %191 = vmatpush.msra.mxu0 %v154
  %192 = vmatmul.f32.gmra.mxu0 %v147
  %v193 = vpop.f32.mrf.mxu0
  %v194 = vadd.f32 0.0, %v193
  %195 = vdwg.mxu0
  %196 = vst [vmem:[#allocation1] ss:$2 sm:$0xff] %v59
  %v197 = vld.sshfl [vmem:[#allocation1] sm:$0xff pattern:$0x75316420]
  %v198 = vld.sshfl [vmem:[#allocation1 + $0x8] sm:$0xff pattern:$0x75316420]
  %v200 = vsel %vm145, %v51, 0
  %v202 = vsel %vm149, %v197, 0
  %v204 = vsel %vm149, %v198, 0
  %206 = vmatpush.msra.mxu0 0.0
  %207 = vmatpush.msra.mxu0 0.0
  %208 = vmatpush.msra.mxu0 0.0
  %209 = vmatpush.msra.mxu0 0.0
  %210 = vmatpush.msra.mxu0 0.0
  %211 = vmatpush.msra.mxu0 0.0
  %212 = vmatpush.msra.mxu0 0.0
  %213 = vmatpush.msra.mxu0 0.0
  %214 = vmatpush.msra.mxu0 0.0
  %215 = vmatpush.msra.mxu0 0.0
  %216 = vmatpush.msra.mxu0 0.0
  %217 = vmatpush.msra.mxu0 0.0
  %218 = vmatpush.msra.mxu0 0.0
  %219 = vmatpush.msra.mxu0 0.0
  %220 = vmatpush.msra.mxu0 0.0
  %221 = vmatpush.msra.mxu0 %v202
  %222 = vmatmul.f32.gmra.mxu0 %v200
  %v223 = vpop.f32.mrf.mxu0
  %v224 = vadd.f32 %v174, %v223
  %225 = vdwg.mxu0
  %226 = vmatpush.msra.mxu0 0.0
  %227 = vmatpush.msra.mxu0 0.0
  %228 = vmatpush.msra.mxu0 0.0
  %229 = vmatpush.msra.mxu0 0.0
  %230 = vmatpush.msra.mxu0 0.0
  %231 = vmatpush.msra.mxu0 0.0
  %232 = vmatpush.msra.mxu0 0.0
  %233 = vmatpush.msra.mxu0 0.0
  %234 = vmatpush.msra.mxu0 0.0
  %235 = vmatpush.msra.mxu0 0.0
  %236 = vmatpush.msra.mxu0 0.0
  %237 = vmatpush.msra.mxu0 0.0
  %238 = vmatpush.msra.mxu0 0.0
  %239 = vmatpush.msra.mxu0 0.0
  %240 = vmatpush.msra.mxu0 0.0
  %241 = vmatpush.msra.mxu0 %v204
  %242 = vmatmul.f32.gmra.mxu0 %v200
  %v243 = vpop.f32.mrf.mxu0
  %v244 = vadd.f32 %v194, %v243
  %245 = vdwg.mxu0
  %v247 = vsel %vm145, %v53, 0
  %v250 = vsel %vm149, %v101, 0
  %v253 = vsel %vm149, %v102, 0
  %255 = vmatpush.msra.mxu0 0.0
  %256 = vmatpush.msra.mxu0 0.0
  %257 = vmatpush.msra.mxu0 0.0
  %258 = vmatpush.msra.mxu0 0.0
  %259 = vmatpush.msra.mxu0 0.0
  %260 = vmatpush.msra.mxu0 0.0
  %261 = vmatpush.msra.mxu0 0.0
  %262 = vmatpush.msra.mxu0 0.0
  %263 = vmatpush.msra.mxu0 0.0
  %264 = vmatpush.msra.mxu0 0.0
  %265 = vmatpush.msra.mxu0 0.0
  %266 = vmatpush.msra.mxu0 0.0
  %267 = vmatpush.msra.mxu0 0.0
  %268 = vmatpush.msra.mxu0 0.0
  %269 = vmatpush.msra.mxu0 0.0
  %270 = vmatpush.msra.mxu0 %v250
  %271 = vmatmul.f32.gmra.mxu0 %v247
  %v272 = vpop.f32.mrf.mxu0
  %v273 = vadd.f32 0.0, %v272
  %274 = vdwg.mxu0
  %275 = vmatpush.msra.mxu0 0.0
  %276 = vmatpush.msra.mxu0 0.0
  %277 = vmatpush.msra.mxu0 0.0
  %278 = vmatpush.msra.mxu0 0.0
  %279 = vmatpush.msra.mxu0 0.0
  %280 = vmatpush.msra.mxu0 0.0
  %281 = vmatpush.msra.mxu0 0.0
  %282 = vmatpush.msra.mxu0 0.0
  %283 = vmatpush.msra.mxu0 0.0
  %284 = vmatpush.msra.mxu0 0.0
  %285 = vmatpush.msra.mxu0 0.0
  %286 = vmatpush.msra.mxu0 0.0
  %287 = vmatpush.msra.mxu0 0.0
  %288 = vmatpush.msra.mxu0 0.0
  %289 = vmatpush.msra.mxu0 0.0
  %290 = vmatpush.msra.mxu0 %v253
  %291 = vmatmul.f32.gmra.mxu0 %v247
  %v292 = vpop.f32.mrf.mxu0
  %v293 = vadd.f32 0.0, %v292
  %294 = vdwg.mxu0
  %v295 = vadd.f32 %v224, %v273
  %v296 = vadd.f32 %v244, %v293
  %v298 = vsel %vm145, %v54, 0
  %v301 = vsel %vm149, %v121, 0
  %v304 = vsel %vm149, %v122, 0
  %306 = vmatpush.msra.mxu0 0.0
  %307 = vmatpush.msra.mxu0 0.0
  %308 = vmatpush.msra.mxu0 0.0
  %309 = vmatpush.msra.mxu0 0.0
  %310 = vmatpush.msra.mxu0 0.0
  %311 = vmatpush.msra.mxu0 0.0
  %312 = vmatpush.msra.mxu0 0.0
  %313 = vmatpush.msra.mxu0 0.0
  %314 = vmatpush.msra.mxu0 0.0
  %315 = vmatpush.msra.mxu0 0.0
  %316 = vmatpush.msra.mxu0 0.0
  %317 = vmatpush.msra.mxu0 0.0
  %318 = vmatpush.msra.mxu0 0.0
  %319 = vmatpush.msra.mxu0 0.0
  %320 = vmatpush.msra.mxu0 0.0
  %321 = vmatpush.msra.mxu0 %v301
  %322 = vmatmul.f32.gmra.mxu0 %v298
  %v323 = vpop.f32.mrf.mxu0
  %v324 = vadd.f32 0.0, %v323
  %325 = vdwg.mxu0
  %326 = vmatpush.msra.mxu0 0.0
  %327 = vmatpush.msra.mxu0 0.0
  %328 = vmatpush.msra.mxu0 0.0
  %329 = vmatpush.msra.mxu0 0.0
  %330 = vmatpush.msra.mxu0 0.0
  %331 = vmatpush.msra.mxu0 0.0
  %332 = vmatpush.msra.mxu0 0.0
  %333 = vmatpush.msra.mxu0 0.0
  %334 = vmatpush.msra.mxu0 0.0
  %335 = vmatpush.msra.mxu0 0.0
  %336 = vmatpush.msra.mxu0 0.0
  %337 = vmatpush.msra.mxu0 0.0
  %338 = vmatpush.msra.mxu0 0.0
  %339 = vmatpush.msra.mxu0 0.0
  %340 = vmatpush.msra.mxu0 0.0
  %341 = vmatpush.msra.mxu0 %v304
  %342 = vmatmul.f32.gmra.mxu0 %v298
  %v343 = vpop.f32.mrf.mxu0
  %v344 = vadd.f32 0.0, %v343
  %345 = vdwg.mxu0
  %v346 = vadd.f32 %v295, %v324
  %v347 = vadd.f32 %v296, %v344
  %v348 = vadd.f32 %v346, %v347
  %349 = vadd.xlane.f32.xlu0 %v348
  %v350 = vpop.xlane.xlu0 %349
  %v351 = vsel %vm123, %v350, 0.0
  %352 = vadd.xlane.f32.xlu0 %v351
  %v353 = vpop.xlane.xlu0 %352
  %v354 = vrot.slane %v353, 4
  %v355 = vadd.f32 %v353, %v354
  %v356 = vrot.slane %v355, 2
  %v357 = vadd.f32 %v355, %v356
  %v358 = vrot.slane %v357, 1
  %v359 = vadd.f32 %v357, %v358
  %s360 = vtos %v359
  %v361 = vmul.f32 %v346, %v346
  %v362 = vmul.f32 %v347, %v347
  %v363 = vadd.f32 %v361, %v362
  %364 = vadd.xlane.f32.xlu0 %v363
  %v365 = vpop.xlane.xlu0 %364
  %v366 = vrot.slane %v365, 4
  %v367 = vadd.f32 %v365, %v366
  %v368 = vrot.slane %v367, 2
  %v369 = vadd.f32 %v367, %v368
  %v370 = vrot.slane %v369, 1
  %v371 = vadd.f32 %v369, %v370
  %s372 = vtos %v371
  %s373 = smul.f32 %s133, 256.0
  %s374 = sadd.f32 %s360, %s373
  %s375 = smul.f32 %s374, 0.00048828125
  %v376 = vmul.f32 %v50, %v350
  %v377 = vsel %vm123, %v376, 0.0
  %378 = vadd.xlane.f32.xlu0 %v377
  %v379 = vpop.xlane.xlu0 %378
  %v380 = vrot.slane %v379, 4
  %v381 = vadd.f32 %v379, %v380
  %v382 = vrot.slane %v381, 2
  %v383 = vadd.f32 %v381, %v382
  %v384 = vrot.slane %v383, 1
  %v385 = vadd.f32 %v383, %v384
  %s386 = vtos %v385
  %s387 = smul.f32 %s386, 2.0
  %s388 = sadd.f32 %s372, %s387
  %s389 = smul.f32 %s144, 256.0
  %s390 = sadd.f32 %s388, %s389
  %s391 = smul.f32 %s390, 0.00048828125
  %s392 = smul.f32 %s375, %s375
  %s393 = ssub.f32 %s391, %s392
  %s394 = smax.f32 %s393, 0.0
  %s395 = sadd.f32 %s394, 1e-05
  %v396 = vstv %s395
  %v397 = vrsqrt.pop %v396
  %v398 = vmul.f32 %v397, %v396
  %v399 = vmul.f32 %v398, %v397
  %v400 = vmul.f32 0.5, %v399
  %v401 = vsub.f32 1.5, %v400
  %v402 = vmul.f32 %v397, %v401
  %vm403 = vweird.f32 %v396
  %vm404 = vweird.f32 %v397
  %vm405 = vmor %vm403, %vm404
  %v406 = vsel %vm405, %v397, %v402
  %s407 = vtos %v406
  %v408 = vstv %s407
  %v409 = vmul.f32 %v50, %v408
  %v410 = vstv %s375
  %v411 = vsub.f32 %v50, %v410
  %413 = vrot.lane.b32.xlu0 %v409, 127
  %v414 = vpop.permute.xlu0 %413
  %v416 = vmul.f32 %v411, %v414
  %418 = vrot.lane.b32.xlu0 %v50, 126
  %v419 = vpop.permute.xlu0 %418
  %v421 = vadd.f32 %v416, %v419
  %422 = vset.pattern.permute.xlu0 1
  %423 = vperm.xlu0 %422, %v409
  %v424 = vpop.permute.xlu0 %423
  %v426 = vmul.f32 %v346, %v424
  %v427 = vmul.f32 %v347, %v424
  %429 = vset.pattern.permute.xlu0 0
  %430 = vperm.xlu0 %429, %v421
  %v431 = vpop.permute.xlu0 %430
  %v433 = vadd.f32 %v426, %v431
  %v434 = vadd.f32 %v427, %v431
  %v435 = vsub.f32 0.0, %v433
  %v436 = vsub.f32 0.0, %v434
  %v437 = vmin.f32 %v435, 80.0
  %v438 = vmin.f32 %v436, 80.0
  %v439 = vmul.f32 %v437, 1.442695
  %v440 = vpow.pop %v439
  %v441 = vmul.f32 %v438, 1.442695
  %v442 = vpow.pop %v441
  %v443 = vadd.f32 %v440, 1.0
  %v444 = vadd.f32 %v442, 1.0
  %v445 = vrcp.pop %v443
  %v446 = vmul.f32 %v443, %v445
  %v447 = vsub.f32 1.0, %v446
  %v448 = vmul.f32 %v445, %v447
  %v449 = vadd.f32 %v445, %v448
  %vm450 = vweird.f32 %v443
  %vm451 = vweird.f32 %v445
  %vm452 = vmor %vm450, %vm451
  %v453 = vsel %vm452, %v445, %v449
  %v454 = vand.u32 2147483647, %v443
  %vm455 = vcmp.eq.f32.partialorder %v454, 8.507059e+37
  %v456 = vand.u32 %v443, 2147483648
  %v457 = vor.u32 1.1754944e-38, %v456
  %v458 = vsel %vm455, %v457, %v453
  %v459 = vrcp.pop %v444
  %v460 = vmul.f32 %v444, %v459
  %v461 = vsub.f32 1.0, %v460
  %v462 = vmul.f32 %v459, %v461
  %v463 = vadd.f32 %v459, %v462
  %vm464 = vweird.f32 %v444
  %vm465 = vweird.f32 %v459
  %vm466 = vmor %vm464, %vm465
  %v467 = vsel %vm466, %v459, %v463
  %v468 = vand.u32 2147483647, %v444
  %vm469 = vcmp.eq.f32.partialorder %v468, 8.507059e+37
  %v470 = vand.u32 %v444, 2147483648
  %v471 = vor.u32 1.1754944e-38, %v470
  %v472 = vsel %vm469, %v471, %v467
  %v473 = vmul.f32 %v433, %v458
  %v474 = vmul.f32 %v434, %v472
  %475 = vst [vmem:[#allocation2] sm:$0xff] %v473
  %476 = vst [vmem:[#allocation2 + $0x8] sm:$0xff] %v474
  %v477 = vrot.slane %v81, 4
  %v478 = vrot.slane %v82, 4
  %v479 = vsel %vm149, %v477, 0
  %v481 = vsel %vm149, %v478, 0
  %483 = vmatpush.msra.mxu0 0.0
  %484 = vmatpush.msra.mxu0 0.0
  %485 = vmatpush.msra.mxu0 0.0
  %486 = vmatpush.msra.mxu0 0.0
  %487 = vmatpush.msra.mxu0 0.0
  %488 = vmatpush.msra.mxu0 0.0
  %489 = vmatpush.msra.mxu0 0.0
  %490 = vmatpush.msra.mxu0 0.0
  %491 = vmatpush.msra.mxu0 0.0
  %492 = vmatpush.msra.mxu0 0.0
  %493 = vmatpush.msra.mxu0 0.0
  %494 = vmatpush.msra.mxu0 0.0
  %495 = vmatpush.msra.mxu0 0.0
  %496 = vmatpush.msra.mxu0 0.0
  %497 = vmatpush.msra.mxu0 0.0
  %498 = vmatpush.msra.mxu0 %v479
  %499 = vmatmul.f32.gmra.mxu0 %v147
  %v500 = vpop.f32.mrf.mxu0
  %v501 = vadd.f32 0.0, %v500
  %502 = vdwg.mxu0
  %503 = vmatpush.msra.mxu0 0.0
  %504 = vmatpush.msra.mxu0 0.0
  %505 = vmatpush.msra.mxu0 0.0
  %506 = vmatpush.msra.mxu0 0.0
  %507 = vmatpush.msra.mxu0 0.0
  %508 = vmatpush.msra.mxu0 0.0
  %509 = vmatpush.msra.mxu0 0.0
  %510 = vmatpush.msra.mxu0 0.0
  %511 = vmatpush.msra.mxu0 0.0
  %512 = vmatpush.msra.mxu0 0.0
  %513 = vmatpush.msra.mxu0 0.0
  %514 = vmatpush.msra.mxu0 0.0
  %515 = vmatpush.msra.mxu0 0.0
  %516 = vmatpush.msra.mxu0 0.0
  %517 = vmatpush.msra.mxu0 0.0
  %518 = vmatpush.msra.mxu0 %v481
  %519 = vmatmul.f32.gmra.mxu0 %v147
  %v520 = vpop.f32.mrf.mxu0
  %v521 = vadd.f32 0.0, %v520
  %522 = vdwg.mxu0
  %523 = vst [vmem:[#allocation1] ss:$2 sm:$0xff] %v60
  %v524 = vld.sshfl [vmem:[#allocation1] sm:$0xff pattern:$0x75316420]
  %v525 = vld.sshfl [vmem:[#allocation1 + $0x8] sm:$0xff pattern:$0x75316420]
  %v526 = vsel %vm149, %v524, 0
  %v528 = vsel %vm149, %v525, 0
  %530 = vmatpush.msra.mxu0 0.0
  %531 = vmatpush.msra.mxu0 0.0
  %532 = vmatpush.msra.mxu0 0.0
  %533 = vmatpush.msra.mxu0 0.0
  %534 = vmatpush.msra.mxu0 0.0
  %535 = vmatpush.msra.mxu0 0.0
  %536 = vmatpush.msra.mxu0 0.0
  %537 = vmatpush.msra.mxu0 0.0
  %538 = vmatpush.msra.mxu0 0.0
  %539 = vmatpush.msra.mxu0 0.0
  %540 = vmatpush.msra.mxu0 0.0
  %541 = vmatpush.msra.mxu0 0.0
  %542 = vmatpush.msra.mxu0 0.0
  %543 = vmatpush.msra.mxu0 0.0
  %544 = vmatpush.msra.mxu0 0.0
  %545 = vmatpush.msra.mxu0 %v526
  %546 = vmatmul.f32.gmra.mxu0 %v200
  %v547 = vpop.f32.mrf.mxu0
  %v548 = vadd.f32 %v501, %v547
  %549 = vdwg.mxu0
  %550 = vmatpush.msra.mxu0 0.0
  %551 = vmatpush.msra.mxu0 0.0
  %552 = vmatpush.msra.mxu0 0.0
  %553 = vmatpush.msra.mxu0 0.0
  %554 = vmatpush.msra.mxu0 0.0
  %555 = vmatpush.msra.mxu0 0.0
  %556 = vmatpush.msra.mxu0 0.0
  %557 = vmatpush.msra.mxu0 0.0
  %558 = vmatpush.msra.mxu0 0.0
  %559 = vmatpush.msra.mxu0 0.0
  %560 = vmatpush.msra.mxu0 0.0
  %561 = vmatpush.msra.mxu0 0.0
  %562 = vmatpush.msra.mxu0 0.0
  %563 = vmatpush.msra.mxu0 0.0
  %564 = vmatpush.msra.mxu0 0.0
  %565 = vmatpush.msra.mxu0 %v528
  %566 = vmatmul.f32.gmra.mxu0 %v200
  %v567 = vpop.f32.mrf.mxu0
  %v568 = vadd.f32 %v521, %v567
  %569 = vdwg.mxu0
  %v570 = vrot.slane %v101, 4
  %v571 = vrot.slane %v102, 4
  %v572 = vsel %vm149, %v570, 0
  %v574 = vsel %vm149, %v571, 0
  %576 = vmatpush.msra.mxu0 0.0
  %577 = vmatpush.msra.mxu0 0.0
  %578 = vmatpush.msra.mxu0 0.0
  %579 = vmatpush.msra.mxu0 0.0
  %580 = vmatpush.msra.mxu0 0.0
  %581 = vmatpush.msra.mxu0 0.0
  %582 = vmatpush.msra.mxu0 0.0
  %583 = vmatpush.msra.mxu0 0.0
  %584 = vmatpush.msra.mxu0 0.0
  %585 = vmatpush.msra.mxu0 0.0
  %586 = vmatpush.msra.mxu0 0.0
  %587 = vmatpush.msra.mxu0 0.0
  %588 = vmatpush.msra.mxu0 0.0
  %589 = vmatpush.msra.mxu0 0.0
  %590 = vmatpush.msra.mxu0 0.0
  %591 = vmatpush.msra.mxu0 %v572
  %592 = vmatmul.f32.gmra.mxu0 %v247
  %v593 = vpop.f32.mrf.mxu0
  %v594 = vadd.f32 0.0, %v593
  %595 = vdwg.mxu0
  %596 = vmatpush.msra.mxu0 0.0
  %597 = vmatpush.msra.mxu0 0.0
  %598 = vmatpush.msra.mxu0 0.0
  %599 = vmatpush.msra.mxu0 0.0
  %600 = vmatpush.msra.mxu0 0.0
  %601 = vmatpush.msra.mxu0 0.0
  %602 = vmatpush.msra.mxu0 0.0
  %603 = vmatpush.msra.mxu0 0.0
  %604 = vmatpush.msra.mxu0 0.0
  %605 = vmatpush.msra.mxu0 0.0
  %606 = vmatpush.msra.mxu0 0.0
  %607 = vmatpush.msra.mxu0 0.0
  %608 = vmatpush.msra.mxu0 0.0
  %609 = vmatpush.msra.mxu0 0.0
  %610 = vmatpush.msra.mxu0 0.0
  %611 = vmatpush.msra.mxu0 %v574
  %612 = vmatmul.f32.gmra.mxu0 %v247
  %v613 = vpop.f32.mrf.mxu0
  %v614 = vadd.f32 0.0, %v613
  %615 = vdwg.mxu0
  %v616 = vadd.f32 %v548, %v594
  %v617 = vadd.f32 %v568, %v614
  %v618 = vrot.slane %v121, 4
  %v619 = vrot.slane %v122, 4
  %v620 = vsel %vm149, %v618, 0
  %v622 = vsel %vm149, %v619, 0
  %624 = vmatpush.msra.mxu0 0.0
  %625 = vmatpush.msra.mxu0 0.0
  %626 = vmatpush.msra.mxu0 0.0
  %627 = vmatpush.msra.mxu0 0.0
  %628 = vmatpush.msra.mxu0 0.0
  %629 = vmatpush.msra.mxu0 0.0
  %630 = vmatpush.msra.mxu0 0.0
  %631 = vmatpush.msra.mxu0 0.0
  %632 = vmatpush.msra.mxu0 0.0
  %633 = vmatpush.msra.mxu0 0.0
  %634 = vmatpush.msra.mxu0 0.0
  %635 = vmatpush.msra.mxu0 0.0
  %636 = vmatpush.msra.mxu0 0.0
  %637 = vmatpush.msra.mxu0 0.0
  %638 = vmatpush.msra.mxu0 0.0
  %639 = vmatpush.msra.mxu0 %v620
  %640 = vmatmul.f32.gmra.mxu0 %v298
  %v641 = vpop.f32.mrf.mxu0
  %v642 = vadd.f32 0.0, %v641
  %643 = vdwg.mxu0
  %644 = vmatpush.msra.mxu0 0.0
  %645 = vmatpush.msra.mxu0 0.0
  %646 = vmatpush.msra.mxu0 0.0
  %647 = vmatpush.msra.mxu0 0.0
  %648 = vmatpush.msra.mxu0 0.0
  %649 = vmatpush.msra.mxu0 0.0
  %650 = vmatpush.msra.mxu0 0.0
  %651 = vmatpush.msra.mxu0 0.0
  %652 = vmatpush.msra.mxu0 0.0
  %653 = vmatpush.msra.mxu0 0.0
  %654 = vmatpush.msra.mxu0 0.0
  %655 = vmatpush.msra.mxu0 0.0
  %656 = vmatpush.msra.mxu0 0.0
  %657 = vmatpush.msra.mxu0 0.0
  %658 = vmatpush.msra.mxu0 0.0
  %659 = vmatpush.msra.mxu0 %v622
  %660 = vmatmul.f32.gmra.mxu0 %v298
  %v661 = vpop.f32.mrf.mxu0
  %v662 = vadd.f32 0.0, %v661
  %663 = vdwg.mxu0
  %v664 = vadd.f32 %v616, %v642
  %v665 = vadd.f32 %v617, %v662
  %v666 = vadd.f32 %v664, %v665
  %667 = vadd.xlane.f32.xlu0 %v666
  %v668 = vpop.xlane.xlu0 %667
  %v669 = vsel %vm123, %v668, 0.0
  %670 = vadd.xlane.f32.xlu0 %v669
  %v671 = vpop.xlane.xlu0 %670
  %v672 = vrot.slane %v671, 4
  %v673 = vadd.f32 %v671, %v672
  %v674 = vrot.slane %v673, 2
  %v675 = vadd.f32 %v673, %v674
  %v676 = vrot.slane %v675, 1
  %v677 = vadd.f32 %v675, %v676
  %s678 = vtos %v677
  %v679 = vmul.f32 %v664, %v664
  %v680 = vmul.f32 %v665, %v665
  %v681 = vadd.f32 %v679, %v680
  %682 = vadd.xlane.f32.xlu0 %v681
  %v683 = vpop.xlane.xlu0 %682
  %v684 = vrot.slane %v683, 4
  %v685 = vadd.f32 %v683, %v684
  %v686 = vrot.slane %v685, 2
  %v687 = vadd.f32 %v685, %v686
  %v688 = vrot.slane %v687, 1
  %v689 = vadd.f32 %v687, %v688
  %s690 = vtos %v689
  %s691 = sadd.f32 %s678, %s373
  %s692 = smul.f32 %s691, 0.00048828125
  %v693 = vmul.f32 %v50, %v668
  %v694 = vsel %vm123, %v693, 0.0
  %695 = vadd.xlane.f32.xlu0 %v694
  %v696 = vpop.xlane.xlu0 %695
  %v697 = vrot.slane %v696, 4
  %v698 = vadd.f32 %v696, %v697
  %v699 = vrot.slane %v698, 2
  %v700 = vadd.f32 %v698, %v699
  %v701 = vrot.slane %v700, 1
  %v702 = vadd.f32 %v700, %v701
  %s703 = vtos %v702
  %s704 = smul.f32 %s703, 2.0
  %s705 = sadd.f32 %s690, %s704
  %s706 = sadd.f32 %s705, %s389
  %s707 = smul.f32 %s706, 0.00048828125
  %s708 = smul.f32 %s692, %s692
  %s709 = ssub.f32 %s707, %s708
  %s710 = smax.f32 %s709, 0.0
  %s711 = sadd.f32 %s710, 1e-05
  %v712 = vstv %s711
  %v713 = vrsqrt.pop %v712
  %v714 = vmul.f32 %v713, %v712
  %v715 = vmul.f32 %v714, %v713
  %v716 = vmul.f32 0.5, %v715
  %v717 = vsub.f32 1.5, %v716
  %v718 = vmul.f32 %v713, %v717
  %vm719 = vweird.f32 %v712
  %vm720 = vweird.f32 %v713
  %vm721 = vmor %vm719, %vm720
  %v722 = vsel %vm721, %v713, %v718
  %s723 = vtos %v722
  %v724 = vstv %s723
  %v725 = vmul.f32 %v50, %v724
  %v726 = vstv %s692
  %v727 = vsub.f32 %v50, %v726
  %729 = vrot.lane.b32.xlu0 %v725, 127
  %v730 = vpop.permute.xlu0 %729
  %v732 = vmul.f32 %v727, %v730
  %v733 = vadd.f32 %v732, %v419
  %734 = vset.pattern.permute.xlu0 1
  %735 = vperm.xlu0 %734, %v725
  %v736 = vpop.permute.xlu0 %735
  %v738 = vmul.f32 %v664, %v736
  %v739 = vmul.f32 %v665, %v736
  %741 = vset.pattern.permute.xlu0 0
  %742 = vperm.xlu0 %741, %v733
  %v743 = vpop.permute.xlu0 %742
  %v745 = vadd.f32 %v738, %v743
  %v746 = vadd.f32 %v739, %v743
  %v747 = vsub.f32 0.0, %v745
  %v748 = vsub.f32 0.0, %v746
  %v749 = vmin.f32 %v747, 80.0
  %v750 = vmin.f32 %v748, 80.0
  %v751 = vmul.f32 %v749, 1.442695
  %v752 = vpow.pop %v751
  %v753 = vmul.f32 %v750, 1.442695
  %v754 = vpow.pop %v753
  %v755 = vadd.f32 %v752, 1.0
  %v756 = vadd.f32 %v754, 1.0
  %v757 = vrcp.pop %v755
  %v758 = vmul.f32 %v755, %v757
  %v759 = vsub.f32 1.0, %v758
  %v760 = vmul.f32 %v757, %v759
  %v761 = vadd.f32 %v757, %v760
  %vm762 = vweird.f32 %v755
  %vm763 = vweird.f32 %v757
  %vm764 = vmor %vm762, %vm763
  %v765 = vsel %vm764, %v757, %v761
  %v766 = vand.u32 2147483647, %v755
  %vm767 = vcmp.eq.f32.partialorder %v766, 8.507059e+37
  %v768 = vand.u32 %v755, 2147483648
  %v769 = vor.u32 1.1754944e-38, %v768
  %v770 = vsel %vm767, %v769, %v765
  %v771 = vrcp.pop %v756
  %v772 = vmul.f32 %v756, %v771
  %v773 = vsub.f32 1.0, %v772
  %v774 = vmul.f32 %v771, %v773
  %v775 = vadd.f32 %v771, %v774
  %vm776 = vweird.f32 %v756
  %vm777 = vweird.f32 %v771
  %vm778 = vmor %vm776, %vm777
  %v779 = vsel %vm778, %v771, %v775
  %v780 = vand.u32 2147483647, %v756
  %vm781 = vcmp.eq.f32.partialorder %v780, 8.507059e+37
  %v782 = vand.u32 %v756, 2147483648
  %v783 = vor.u32 1.1754944e-38, %v782
  %v784 = vsel %vm781, %v783, %v779
  %v785 = vmul.f32 %v745, %v770
  %v786 = vmul.f32 %v746, %v784
  %s787 = scalar_lea.vmem [#allocation2], 16
  %788 = vst [vmem:[%s787] sm:$0xff] %v785
  %789 = vst [vmem:[%s787 + $0x8] sm:$0xff] %v786
  %v790 = vld [vmem:[#allocation2] sm:$0xff]
  %v791 = vld [vmem:[#allocation2 + $0x8] sm:$0xff]
  %v792 = vld [vmem:[#allocation2 + $0x10] sm:$0xff]
  %v793 = vld [vmem:[#allocation2 + $0x18] sm:$0xff]
  %794 = vrot.lane.b32.xlu0 %v790, 127
  %v795 = vpop.permute.xlu0 %794
  %796 = vrot.lane.b32.xlu0 %v792, 127
  %v797 = vpop.permute.xlu0 %796
  %798 = vrot.lane.b32.xlu0 %v791, 127
  %v799 = vpop.permute.xlu0 %798
  %800 = vrot.lane.b32.xlu0 %v793, 127
  %v801 = vpop.permute.xlu0 %800
  %v802 = vsel %vm74, %v795, %v799
  %v803 = vsel %vm74, %v797, %v801
  %v804 = vsel %vm74, %v799, %v795
  %v805 = vsel %vm74, %v801, %v797
  %v806 = vsel %vm79, 0.0, %v802
  %v807 = vsel %vm80, 0.0, %v804
  %v808 = vsel %vm79, 0.0, %v803
  %v809 = vsel %vm80, 0.0, %v805
  %810 = vrot.lane.b32.xlu0 %v790, 112
  %v811 = vpop.permute.xlu0 %810
  %812 = vrot.lane.b32.xlu0 %v792, 112
  %v813 = vpop.permute.xlu0 %812
  %814 = vrot.lane.b32.xlu0 %v791, 112
  %v815 = vpop.permute.xlu0 %814
  %816 = vrot.lane.b32.xlu0 %v793, 112
  %v817 = vpop.permute.xlu0 %816
  %v818 = vsel %vm94, %v811, %v815
  %v819 = vsel %vm94, %v813, %v817
  %v820 = vsel %vm94, %v815, %v811
  %v821 = vsel %vm94, %v817, %v813
  %v822 = vsel %vm99, 0.0, %v818
  %v823 = vsel %vm100, 0.0, %v820
  %v824 = vsel %vm99, 0.0, %v819
  %v825 = vsel %vm100, 0.0, %v821
  %826 = vrot.lane.b32.xlu0 %v790, 111
  %v827 = vpop.permute.xlu0 %826
  %828 = vrot.lane.b32.xlu0 %v792, 111
  %v829 = vpop.permute.xlu0 %828
  %830 = vrot.lane.b32.xlu0 %v791, 111
  %v831 = vpop.permute.xlu0 %830
  %832 = vrot.lane.b32.xlu0 %v793, 111
  %v833 = vpop.permute.xlu0 %832
  %v834 = vsel %vm114, %v827, %v831
  %v835 = vsel %vm114, %v829, %v833
  %v836 = vsel %vm114, %v831, %v827
  %v837 = vsel %vm114, %v833, %v829
  %v838 = vsel %vm119, 0.0, %v834
  %v839 = vsel %vm120, 0.0, %v836
  %v840 = vsel %vm119, 0.0, %v835
  %v841 = vsel %vm120, 0.0, %v837
  %842 = vrot.lane.b32.xlu0 %v50, 125
  %v843 = vpop.permute.xlu0 %842
  %v845 = vsel %vm123, %v843, 0.0
  %846 = vadd.xlane.f32.xlu0 %v845
  %v847 = vpop.xlane.xlu0 %846
  %v848 = vrot.slane %v847, 4
  %v849 = vadd.f32 %v847, %v848
  %v850 = vrot.slane %v849, 2
  %v851 = vadd.f32 %v849, %v850
  %v852 = vrot.slane %v851, 1
  %v853 = vadd.f32 %v851, %v852
  %s854 = vtos %v853
  %856 = vrot.lane.b32.xlu0 %v134, 125
  %v857 = vpop.permute.xlu0 %856
  %v859 = vsel %vm123, %v857, 0.0
  %860 = vadd.xlane.f32.xlu0 %v859
  %v861 = vpop.xlane.xlu0 %860
  %v862 = vrot.slane %v861, 4
  %v863 = vadd.f32 %v861, %v862
  %v864 = vrot.slane %v863, 2
  %v865 = vadd.f32 %v863, %v864
  %v866 = vrot.slane %v865, 1
  %v867 = vadd.f32 %v865, %v866
  %s868 = vtos %v867
  %vm869 = vcmask 64512
  %v871 = vsel %vm869, %v56, 0
  %873 = vmatpush.msra.mxu0 0.0
  %874 = vmatpush.msra.mxu0 0.0
  %875 = vmatpush.msra.mxu0 0.0
  %876 = vmatpush.msra.mxu0 0.0
  %877 = vmatpush.msra.mxu0 0.0
  %878 = vmatpush.msra.mxu0 0.0
  %879 = vmatpush.msra.mxu0 0.0
  %880 = vmatpush.msra.mxu0 0.0
  %881 = vmatpush.msra.mxu0 0.0
  %882 = vmatpush.msra.mxu0 0.0
  %883 = vmatpush.msra.mxu0 0.0
  %884 = vmatpush.msra.mxu0 0.0
  %885 = vmatpush.msra.mxu0 0.0
  %886 = vmatpush.msra.mxu0 0.0
  %887 = vmatpush.msra.mxu0 0.0
  %888 = vmatpush.msra.mxu0 %v806
  %889 = vmatmul.f32.gmra.mxu0 %v871
  %v890 = vpop.f32.mrf.mxu0
  %v891 = vadd.f32 0.0, %v890
  %892 = vdwg.mxu0
  %893 = vmatpush.msra.mxu0 0.0
  %894 = vmatpush.msra.mxu0 0.0
  %895 = vmatpush.msra.mxu0 0.0
  %896 = vmatpush.msra.mxu0 0.0
  %897 = vmatpush.msra.mxu0 0.0
  %898 = vmatpush.msra.mxu0 0.0
  %899 = vmatpush.msra.mxu0 0.0
  %900 = vmatpush.msra.mxu0 0.0
  %901 = vmatpush.msra.mxu0 0.0
  %902 = vmatpush.msra.mxu0 0.0
  %903 = vmatpush.msra.mxu0 0.0
  %904 = vmatpush.msra.mxu0 0.0
  %905 = vmatpush.msra.mxu0 0.0
  %906 = vmatpush.msra.mxu0 0.0
  %907 = vmatpush.msra.mxu0 0.0
  %908 = vmatpush.msra.mxu0 %v807
  %909 = vmatmul.f32.gmra.mxu0 %v871
  %v910 = vpop.f32.mrf.mxu0
  %v911 = vadd.f32 0.0, %v910
  %912 = vdwg.mxu0
  %v914 = vsel %vm869, %v55, 0
  %916 = vmatpush.msra.mxu0 0.0
  %917 = vmatpush.msra.mxu0 0.0
  %918 = vmatpush.msra.mxu0 0.0
  %919 = vmatpush.msra.mxu0 0.0
  %920 = vmatpush.msra.mxu0 0.0
  %921 = vmatpush.msra.mxu0 0.0
  %922 = vmatpush.msra.mxu0 0.0
  %923 = vmatpush.msra.mxu0 0.0
  %924 = vmatpush.msra.mxu0 0.0
  %925 = vmatpush.msra.mxu0 0.0
  %926 = vmatpush.msra.mxu0 0.0
  %927 = vmatpush.msra.mxu0 0.0
  %928 = vmatpush.msra.mxu0 0.0
  %929 = vmatpush.msra.mxu0 0.0
  %930 = vmatpush.msra.mxu0 0.0
  %931 = vmatpush.msra.mxu0 %v790
  %932 = vmatmul.f32.gmra.mxu0 %v914
  %v933 = vpop.f32.mrf.mxu0
  %v934 = vadd.f32 %v891, %v933
  %935 = vdwg.mxu0
  %936 = vmatpush.msra.mxu0 0.0
  %937 = vmatpush.msra.mxu0 0.0
  %938 = vmatpush.msra.mxu0 0.0
  %939 = vmatpush.msra.mxu0 0.0
  %940 = vmatpush.msra.mxu0 0.0
  %941 = vmatpush.msra.mxu0 0.0
  %942 = vmatpush.msra.mxu0 0.0
  %943 = vmatpush.msra.mxu0 0.0
  %944 = vmatpush.msra.mxu0 0.0
  %945 = vmatpush.msra.mxu0 0.0
  %946 = vmatpush.msra.mxu0 0.0
  %947 = vmatpush.msra.mxu0 0.0
  %948 = vmatpush.msra.mxu0 0.0
  %949 = vmatpush.msra.mxu0 0.0
  %950 = vmatpush.msra.mxu0 0.0
  %951 = vmatpush.msra.mxu0 %v791
  %952 = vmatmul.f32.gmra.mxu0 %v914
  %v953 = vpop.f32.mrf.mxu0
  %v954 = vadd.f32 %v911, %v953
  %955 = vdwg.mxu0
  %v957 = vsel %vm869, %v57, 0
  %959 = vmatpush.msra.mxu0 0.0
  %960 = vmatpush.msra.mxu0 0.0
  %961 = vmatpush.msra.mxu0 0.0
  %962 = vmatpush.msra.mxu0 0.0
  %963 = vmatpush.msra.mxu0 0.0
  %964 = vmatpush.msra.mxu0 0.0
  %965 = vmatpush.msra.mxu0 0.0
  %966 = vmatpush.msra.mxu0 0.0
  %967 = vmatpush.msra.mxu0 0.0
  %968 = vmatpush.msra.mxu0 0.0
  %969 = vmatpush.msra.mxu0 0.0
  %970 = vmatpush.msra.mxu0 0.0
  %971 = vmatpush.msra.mxu0 0.0
  %972 = vmatpush.msra.mxu0 0.0
  %973 = vmatpush.msra.mxu0 0.0
  %974 = vmatpush.msra.mxu0 %v822
  %975 = vmatmul.f32.gmra.mxu0 %v957
  %v976 = vpop.f32.mrf.mxu0
  %v977 = vadd.f32 0.0, %v976
  %978 = vdwg.mxu0
  %979 = vmatpush.msra.mxu0 0.0
  %980 = vmatpush.msra.mxu0 0.0
  %981 = vmatpush.msra.mxu0 0.0
  %982 = vmatpush.msra.mxu0 0.0
  %983 = vmatpush.msra.mxu0 0.0
  %984 = vmatpush.msra.mxu0 0.0
  %985 = vmatpush.msra.mxu0 0.0
  %986 = vmatpush.msra.mxu0 0.0
  %987 = vmatpush.msra.mxu0 0.0
  %988 = vmatpush.msra.mxu0 0.0
  %989 = vmatpush.msra.mxu0 0.0
  %990 = vmatpush.msra.mxu0 0.0
  %991 = vmatpush.msra.mxu0 0.0
  %992 = vmatpush.msra.mxu0 0.0
  %993 = vmatpush.msra.mxu0 0.0
  %994 = vmatpush.msra.mxu0 %v823
  %995 = vmatmul.f32.gmra.mxu0 %v957
  %v996 = vpop.f32.mrf.mxu0
  %v997 = vadd.f32 0.0, %v996
  %998 = vdwg.mxu0
  %v999 = vadd.f32 %v934, %v977
  %v1000 = vadd.f32 %v954, %v997
  %v1002 = vsel %vm869, %v58, 0
  %1004 = vmatpush.msra.mxu0 0.0
  %1005 = vmatpush.msra.mxu0 0.0
  %1006 = vmatpush.msra.mxu0 0.0
  %1007 = vmatpush.msra.mxu0 0.0
  %1008 = vmatpush.msra.mxu0 0.0
  %1009 = vmatpush.msra.mxu0 0.0
  %1010 = vmatpush.msra.mxu0 0.0
  %1011 = vmatpush.msra.mxu0 0.0
  %1012 = vmatpush.msra.mxu0 0.0
  %1013 = vmatpush.msra.mxu0 0.0
  %1014 = vmatpush.msra.mxu0 0.0
  %1015 = vmatpush.msra.mxu0 0.0
  %1016 = vmatpush.msra.mxu0 0.0
  %1017 = vmatpush.msra.mxu0 0.0
  %1018 = vmatpush.msra.mxu0 0.0
  %1019 = vmatpush.msra.mxu0 %v838
  %1020 = vmatmul.f32.gmra.mxu0 %v1002
  %v1021 = vpop.f32.mrf.mxu0
  %v1022 = vadd.f32 0.0, %v1021
  %1023 = vdwg.mxu0
  %1024 = vmatpush.msra.mxu0 0.0
  %1025 = vmatpush.msra.mxu0 0.0
  %1026 = vmatpush.msra.mxu0 0.0
  %1027 = vmatpush.msra.mxu0 0.0
  %1028 = vmatpush.msra.mxu0 0.0
  %1029 = vmatpush.msra.mxu0 0.0
  %1030 = vmatpush.msra.mxu0 0.0
  %1031 = vmatpush.msra.mxu0 0.0
  %1032 = vmatpush.msra.mxu0 0.0
  %1033 = vmatpush.msra.mxu0 0.0
  %1034 = vmatpush.msra.mxu0 0.0
  %1035 = vmatpush.msra.mxu0 0.0
  %1036 = vmatpush.msra.mxu0 0.0
  %1037 = vmatpush.msra.mxu0 0.0
  %1038 = vmatpush.msra.mxu0 0.0
  %1039 = vmatpush.msra.mxu0 %v839
  %1040 = vmatmul.f32.gmra.mxu0 %v1002
  %v1041 = vpop.f32.mrf.mxu0
  %v1042 = vadd.f32 0.0, %v1041
  %1043 = vdwg.mxu0
  %v1044 = vadd.f32 %v999, %v1022
  %v1045 = vadd.f32 %v1000, %v1042
  %v1046 = vadd.f32 %v1044, %v1045
  %1047 = vadd.xlane.f32.xlu0 %v1046
  %v1048 = vpop.xlane.xlu0 %1047
  %v1049 = vsel %vm123, %v1048, 0.0
  %1050 = vadd.xlane.f32.xlu0 %v1049
  %v1051 = vpop.xlane.xlu0 %1050
  %v1052 = vrot.slane %v1051, 4
  %v1053 = vadd.f32 %v1051, %v1052
  %v1054 = vrot.slane %v1053, 2
  %v1055 = vadd.f32 %v1053, %v1054
  %v1056 = vrot.slane %v1055, 1
  %v1057 = vadd.f32 %v1055, %v1056
  %s1058 = vtos %v1057
  %v1059 = vmul.f32 %v1044, %v1044
  %v1060 = vmul.f32 %v1045, %v1045
  %v1061 = vadd.f32 %v1059, %v1060
  %1062 = vadd.xlane.f32.xlu0 %v1061
  %v1063 = vpop.xlane.xlu0 %1062
  %v1064 = vrot.slane %v1063, 4
  %v1065 = vadd.f32 %v1063, %v1064
  %v1066 = vrot.slane %v1065, 2
  %v1067 = vadd.f32 %v1065, %v1066
  %v1068 = vrot.slane %v1067, 1
  %v1069 = vadd.f32 %v1067, %v1068
  %s1070 = vtos %v1069
  %s1071 = smul.f32 %s854, 256.0
  %s1072 = sadd.f32 %s1058, %s1071
  %s1073 = smul.f32 %s1072, 0.00048828125
  %v1074 = vmul.f32 %v50, %v1048
  %1076 = vrot.lane.b32.xlu0 %v1074, 125
  %v1077 = vpop.permute.xlu0 %1076
  %v1079 = vsel %vm123, %v1077, 0.0
  %1080 = vadd.xlane.f32.xlu0 %v1079
  %v1081 = vpop.xlane.xlu0 %1080
  %v1082 = vrot.slane %v1081, 4
  %v1083 = vadd.f32 %v1081, %v1082
  %v1084 = vrot.slane %v1083, 2
  %v1085 = vadd.f32 %v1083, %v1084
  %v1086 = vrot.slane %v1085, 1
  %v1087 = vadd.f32 %v1085, %v1086
  %s1088 = vtos %v1087
  %s1089 = smul.f32 %s1088, 2.0
  %s1090 = sadd.f32 %s1070, %s1089
  %s1091 = smul.f32 %s868, 256.0
  %s1092 = sadd.f32 %s1090, %s1091
  %s1093 = smul.f32 %s1092, 0.00048828125
  %s1094 = smul.f32 %s1073, %s1073
  %s1095 = ssub.f32 %s1093, %s1094
  %s1096 = smax.f32 %s1095, 0.0
  %s1097 = sadd.f32 %s1096, 1e-05
  %v1098 = vstv %s1097
  %v1099 = vrsqrt.pop %v1098
  %v1100 = vmul.f32 %v1099, %v1098
  %v1101 = vmul.f32 %v1100, %v1099
  %v1102 = vmul.f32 0.5, %v1101
  %v1103 = vsub.f32 1.5, %v1102
  %v1104 = vmul.f32 %v1099, %v1103
  %vm1105 = vweird.f32 %v1098
  %vm1106 = vweird.f32 %v1099
  %vm1107 = vmor %vm1105, %vm1106
  %v1108 = vsel %vm1107, %v1099, %v1104
  %s1109 = vtos %v1108
  %v1110 = vstv %s1109
  %v1111 = vmul.f32 %v50, %v1110
  %v1112 = vstv %s1073
  %v1113 = vsub.f32 %v50, %v1112
  %1115 = vrot.lane.b32.xlu0 %v1111, 127
  %v1116 = vpop.permute.xlu0 %1115
  %v1118 = vmul.f32 %v1113, %v1116
  %v1119 = vadd.f32 %v1118, %v419
  %1120 = vset.pattern.permute.xlu0 4
  %1121 = vperm.xlu0 %1120, %v1111
  %v1122 = vpop.permute.xlu0 %1121
  %v1124 = vmul.f32 %v1044, %v1122
  %v1125 = vmul.f32 %v1045, %v1122
  %1127 = vset.pattern.permute.xlu0 3
  %1128 = vperm.xlu0 %1127, %v1119
  %v1129 = vpop.permute.xlu0 %1128
  %v1131 = vadd.f32 %v1124, %v1129
  %v1132 = vadd.f32 %v1125, %v1129
  %v1133 = vsub.f32 0.0, %v1131
  %v1134 = vsub.f32 0.0, %v1132
  %v1135 = vmin.f32 %v1133, 80.0
  %v1136 = vmin.f32 %v1134, 80.0
  %v1137 = vmul.f32 %v1135, 1.442695
  %v1138 = vpow.pop %v1137
  %v1139 = vmul.f32 %v1136, 1.442695
  %v1140 = vpow.pop %v1139
  %v1141 = vadd.f32 %v1138, 1.0
  %v1142 = vadd.f32 %v1140, 1.0
  %v1143 = vrcp.pop %v1141
  %v1144 = vmul.f32 %v1141, %v1143
  %v1145 = vsub.f32 1.0, %v1144
  %v1146 = vmul.f32 %v1143, %v1145
  %v1147 = vadd.f32 %v1143, %v1146
  %vm1148 = vweird.f32 %v1141
  %vm1149 = vweird.f32 %v1143
  %vm1150 = vmor %vm1148, %vm1149
  %v1151 = vsel %vm1150, %v1143, %v1147
  %v1152 = vand.u32 2147483647, %v1141
  %vm1153 = vcmp.eq.f32.partialorder %v1152, 8.507059e+37
  %v1154 = vand.u32 %v1141, 2147483648
  %v1155 = vor.u32 1.1754944e-38, %v1154
  %v1156 = vsel %vm1153, %v1155, %v1151
  %v1157 = vrcp.pop %v1142
  %v1158 = vmul.f32 %v1142, %v1157
  %v1159 = vsub.f32 1.0, %v1158
  %v1160 = vmul.f32 %v1157, %v1159
  %v1161 = vadd.f32 %v1157, %v1160
  %vm1162 = vweird.f32 %v1142
  %vm1163 = vweird.f32 %v1157
  %vm1164 = vmor %vm1162, %vm1163
  %v1165 = vsel %vm1164, %v1157, %v1161
  %v1166 = vand.u32 2147483647, %v1142
  %vm1167 = vcmp.eq.f32.partialorder %v1166, 8.507059e+37
  %v1168 = vand.u32 %v1142, 2147483648
  %v1169 = vor.u32 1.1754944e-38, %v1168
  %v1170 = vsel %vm1167, %v1169, %v1165
  %v1171 = vmul.f32 %v1131, %v1156
  %v1172 = vmul.f32 %v1132, %v1170
  %1173 = vst [vmem:[%s4] sm:$0xff] %v1171
  %1174 = vst [vmem:[%s4 + $0x8] sm:$0xff] %v1172
  %1175 = vmatpush.msra.mxu0 0.0
  %1176 = vmatpush.msra.mxu0 0.0
  %1177 = vmatpush.msra.mxu0 0.0
  %1178 = vmatpush.msra.mxu0 0.0
  %1179 = vmatpush.msra.mxu0 0.0
  %1180 = vmatpush.msra.mxu0 0.0
  %1181 = vmatpush.msra.mxu0 0.0
  %1182 = vmatpush.msra.mxu0 0.0
  %1183 = vmatpush.msra.mxu0 0.0
  %1184 = vmatpush.msra.mxu0 0.0
  %1185 = vmatpush.msra.mxu0 0.0
  %1186 = vmatpush.msra.mxu0 0.0
  %1187 = vmatpush.msra.mxu0 0.0
  %1188 = vmatpush.msra.mxu0 0.0
  %1189 = vmatpush.msra.mxu0 0.0
  %1190 = vmatpush.msra.mxu0 %v808
  %1191 = vmatmul.f32.gmra.mxu0 %v871
  %v1192 = vpop.f32.mrf.mxu0
  %v1193 = vadd.f32 0.0, %v1192
  %1194 = vdwg.mxu0
  %1195 = vmatpush.msra.mxu0 0.0
  %1196 = vmatpush.msra.mxu0 0.0
  %1197 = vmatpush.msra.mxu0 0.0
  %1198 = vmatpush.msra.mxu0 0.0
  %1199 = vmatpush.msra.mxu0 0.0
  %1200 = vmatpush.msra.mxu0 0.0
  %1201 = vmatpush.msra.mxu0 0.0
  %1202 = vmatpush.msra.mxu0 0.0
  %1203 = vmatpush.msra.mxu0 0.0
  %1204 = vmatpush.msra.mxu0 0.0
  %1205 = vmatpush.msra.mxu0 0.0
  %1206 = vmatpush.msra.mxu0 0.0
  %1207 = vmatpush.msra.mxu0 0.0
  %1208 = vmatpush.msra.mxu0 0.0
  %1209 = vmatpush.msra.mxu0 0.0
  %1210 = vmatpush.msra.mxu0 %v809
  %1211 = vmatmul.f32.gmra.mxu0 %v871
  %v1212 = vpop.f32.mrf.mxu0
  %v1213 = vadd.f32 0.0, %v1212
  %1214 = vdwg.mxu0
  %1215 = vmatpush.msra.mxu0 0.0
  %1216 = vmatpush.msra.mxu0 0.0
  %1217 = vmatpush.msra.mxu0 0.0
  %1218 = vmatpush.msra.mxu0 0.0
  %1219 = vmatpush.msra.mxu0 0.0
  %1220 = vmatpush.msra.mxu0 0.0
  %1221 = vmatpush.msra.mxu0 0.0
  %1222 = vmatpush.msra.mxu0 0.0
  %1223 = vmatpush.msra.mxu0 0.0
  %1224 = vmatpush.msra.mxu0 0.0
  %1225 = vmatpush.msra.mxu0 0.0
  %1226 = vmatpush.msra.mxu0 0.0
  %1227 = vmatpush.msra.mxu0 0.0
  %1228 = vmatpush.msra.mxu0 0.0
  %1229 = vmatpush.msra.mxu0 0.0
  %1230 = vmatpush.msra.mxu0 %v792
  %1231 = vmatmul.f32.gmra.mxu0 %v914
  %v1232 = vpop.f32.mrf.mxu0
  %v1233 = vadd.f32 %v1193, %v1232
  %1234 = vdwg.mxu0
  %1235 = vmatpush.msra.mxu0 0.0
  %1236 = vmatpush.msra.mxu0 0.0
  %1237 = vmatpush.msra.mxu0 0.0
  %1238 = vmatpush.msra.mxu0 0.0
  %1239 = vmatpush.msra.mxu0 0.0
  %1240 = vmatpush.msra.mxu0 0.0
  %1241 = vmatpush.msra.mxu0 0.0
  %1242 = vmatpush.msra.mxu0 0.0
  %1243 = vmatpush.msra.mxu0 0.0
  %1244 = vmatpush.msra.mxu0 0.0
  %1245 = vmatpush.msra.mxu0 0.0
  %1246 = vmatpush.msra.mxu0 0.0
  %1247 = vmatpush.msra.mxu0 0.0
  %1248 = vmatpush.msra.mxu0 0.0
  %1249 = vmatpush.msra.mxu0 0.0
  %1250 = vmatpush.msra.mxu0 %v793
  %1251 = vmatmul.f32.gmra.mxu0 %v914
  %v1252 = vpop.f32.mrf.mxu0
  %v1253 = vadd.f32 %v1213, %v1252
  %1254 = vdwg.mxu0
  %1255 = vmatpush.msra.mxu0 0.0
  %1256 = vmatpush.msra.mxu0 0.0
  %1257 = vmatpush.msra.mxu0 0.0
  %1258 = vmatpush.msra.mxu0 0.0
  %1259 = vmatpush.msra.mxu0 0.0
  %1260 = vmatpush.msra.mxu0 0.0
  %1261 = vmatpush.msra.mxu0 0.0
  %1262 = vmatpush.msra.mxu0 0.0
  %1263 = vmatpush.msra.mxu0 0.0
  %1264 = vmatpush.msra.mxu0 0.0
  %1265 = vmatpush.msra.mxu0 0.0
  %1266 = vmatpush.msra.mxu0 0.0
  %1267 = vmatpush.msra.mxu0 0.0
  %1268 = vmatpush.msra.mxu0 0.0
  %1269 = vmatpush.msra.mxu0 0.0
  %1270 = vmatpush.msra.mxu0 %v824
  %1271 = vmatmul.f32.gmra.mxu0 %v957
  %v1272 = vpop.f32.mrf.mxu0
  %v1273 = vadd.f32 0.0, %v1272
  %1274 = vdwg.mxu0
  %1275 = vmatpush.msra.mxu0 0.0
  %1276 = vmatpush.msra.mxu0 0.0
  %1277 = vmatpush.msra.mxu0 0.0
  %1278 = vmatpush.msra.mxu0 0.0
  %1279 = vmatpush.msra.mxu0 0.0
  %1280 = vmatpush.msra.mxu0 0.0
  %1281 = vmatpush.msra.mxu0 0.0
  %1282 = vmatpush.msra.mxu0 0.0
  %1283 = vmatpush.msra.mxu0 0.0
  %1284 = vmatpush.msra.mxu0 0.0
  %1285 = vmatpush.msra.mxu0 0.0
  %1286 = vmatpush.msra.mxu0 0.0
  %1287 = vmatpush.msra.mxu0 0.0
  %1288 = vmatpush.msra.mxu0 0.0
  %1289 = vmatpush.msra.mxu0 0.0
  %1290 = vmatpush.msra.mxu0 %v825
  %1291 = vmatmul.f32.gmra.mxu0 %v957
  %v1292 = vpop.f32.mrf.mxu0
  %v1293 = vadd.f32 0.0, %v1292
  %1294 = vdwg.mxu0
  %v1295 = vadd.f32 %v1233, %v1273
  %v1296 = vadd.f32 %v1253, %v1293
  %1297 = vmatpush.msra.mxu0 0.0
  %1298 = vmatpush.msra.mxu0 0.0
  %1299 = vmatpush.msra.mxu0 0.0
  %1300 = vmatpush.msra.mxu0 0.0
  %1301 = vmatpush.msra.mxu0 0.0
  %1302 = vmatpush.msra.mxu0 0.0
  %1303 = vmatpush.msra.mxu0 0.0
  %1304 = vmatpush.msra.mxu0 0.0
  %1305 = vmatpush.msra.mxu0 0.0
  %1306 = vmatpush.msra.mxu0 0.0
  %1307 = vmatpush.msra.mxu0 0.0
  %1308 = vmatpush.msra.mxu0 0.0
  %1309 = vmatpush.msra.mxu0 0.0
  %1310 = vmatpush.msra.mxu0 0.0
  %1311 = vmatpush.msra.mxu0 0.0
  %1312 = vmatpush.msra.mxu0 %v840
  %1313 = vmatmul.f32.gmra.mxu0 %v1002
  %v1314 = vpop.f32.mrf.mxu0
  %v1315 = vadd.f32 0.0, %v1314
  %1316 = vdwg.mxu0
  %1317 = vmatpush.msra.mxu0 0.0
  %1318 = vmatpush.msra.mxu0 0.0
  %1319 = vmatpush.msra.mxu0 0.0
  %1320 = vmatpush.msra.mxu0 0.0
  %1321 = vmatpush.msra.mxu0 0.0
  %1322 = vmatpush.msra.mxu0 0.0
  %1323 = vmatpush.msra.mxu0 0.0
  %1324 = vmatpush.msra.mxu0 0.0
  %1325 = vmatpush.msra.mxu0 0.0
  %1326 = vmatpush.msra.mxu0 0.0
  %1327 = vmatpush.msra.mxu0 0.0
  %1328 = vmatpush.msra.mxu0 0.0
  %1329 = vmatpush.msra.mxu0 0.0
  %1330 = vmatpush.msra.mxu0 0.0
  %1331 = vmatpush.msra.mxu0 0.0
  %1332 = vmatpush.msra.mxu0 %v841
  %1333 = vmatmul.f32.gmra.mxu0 %v1002
  %v1334 = vpop.f32.mrf.mxu0
  %v1335 = vadd.f32 0.0, %v1334
  %1336 = vdwg.mxu0
  %v1337 = vadd.f32 %v1295, %v1315
  %v1338 = vadd.f32 %v1296, %v1335
  %v1339 = vadd.f32 %v1337, %v1338
  %1340 = vadd.xlane.f32.xlu0 %v1339
  %v1341 = vpop.xlane.xlu0 %1340
  %v1342 = vsel %vm123, %v1341, 0.0
  %1343 = vadd.xlane.f32.xlu0 %v1342
  %v1344 = vpop.xlane.xlu0 %1343
  %v1345 = vrot.slane %v1344, 4
  %v1346 = vadd.f32 %v1344, %v1345
  %v1347 = vrot.slane %v1346, 2
  %v1348 = vadd.f32 %v1346, %v1347
  %v1349 = vrot.slane %v1348, 1
  %v1350 = vadd.f32 %v1348, %v1349
  %s1351 = vtos %v1350
  %v1352 = vmul.f32 %v1337, %v1337
  %v1353 = vmul.f32 %v1338, %v1338
  %v1354 = vadd.f32 %v1352, %v1353
  %1355 = vadd.xlane.f32.xlu0 %v1354
  %v1356 = vpop.xlane.xlu0 %1355
  %v1357 = vrot.slane %v1356, 4
  %v1358 = vadd.f32 %v1356, %v1357
  %v1359 = vrot.slane %v1358, 2
  %v1360 = vadd.f32 %v1358, %v1359
  %v1361 = vrot.slane %v1360, 1
  %v1362 = vadd.f32 %v1360, %v1361
  %s1363 = vtos %v1362
  %s1364 = sadd.f32 %s1351, %s1071
  %s1365 = smul.f32 %s1364, 0.00048828125
  %v1366 = vmul.f32 %v50, %v1341
  %1368 = vrot.lane.b32.xlu0 %v1366, 125
  %v1369 = vpop.permute.xlu0 %1368
  %v1371 = vsel %vm123, %v1369, 0.0
  %1372 = vadd.xlane.f32.xlu0 %v1371
  %v1373 = vpop.xlane.xlu0 %1372
  %v1374 = vrot.slane %v1373, 4
  %v1375 = vadd.f32 %v1373, %v1374
  %v1376 = vrot.slane %v1375, 2
  %v1377 = vadd.f32 %v1375, %v1376
  %v1378 = vrot.slane %v1377, 1
  %v1379 = vadd.f32 %v1377, %v1378
  %s1380 = vtos %v1379
  %s1381 = smul.f32 %s1380, 2.0
  %s1382 = sadd.f32 %s1363, %s1381
  %s1383 = sadd.f32 %s1382, %s1091
  %s1384 = smul.f32 %s1383, 0.00048828125
  %s1385 = smul.f32 %s1365, %s1365
  %s1386 = ssub.f32 %s1384, %s1385
  %s1387 = smax.f32 %s1386, 0.0
  %s1388 = sadd.f32 %s1387, 1e-05
  %v1389 = vstv %s1388
  %v1390 = vrsqrt.pop %v1389
  %v1391 = vmul.f32 %v1390, %v1389
  %v1392 = vmul.f32 %v1391, %v1390
  %v1393 = vmul.f32 0.5, %v1392
  %v1394 = vsub.f32 1.5, %v1393
  %v1395 = vmul.f32 %v1390, %v1394
  %vm1396 = vweird.f32 %v1389
  %vm1397 = vweird.f32 %v1390
  %vm1398 = vmor %vm1396, %vm1397
  %v1399 = vsel %vm1398, %v1390, %v1395
  %s1400 = vtos %v1399
  %v1401 = vstv %s1400
  %v1402 = vmul.f32 %v50, %v1401
  %v1403 = vstv %s1365
  %v1404 = vsub.f32 %v50, %v1403
  %1406 = vrot.lane.b32.xlu0 %v1402, 127
  %v1407 = vpop.permute.xlu0 %1406
  %v1409 = vmul.f32 %v1404, %v1407
  %v1410 = vadd.f32 %v1409, %v419
  %1411 = vset.pattern.permute.xlu0 4
  %1412 = vperm.xlu0 %1411, %v1402
  %v1413 = vpop.permute.xlu0 %1412
  %v1415 = vmul.f32 %v1337, %v1413
  %v1416 = vmul.f32 %v1338, %v1413
  %1418 = vset.pattern.permute.xlu0 3
  %1419 = vperm.xlu0 %1418, %v1410
  %v1420 = vpop.permute.xlu0 %1419
  %v1422 = vadd.f32 %v1415, %v1420
  %v1423 = vadd.f32 %v1416, %v1420
  %v1424 = vsub.f32 0.0, %v1422
  %v1425 = vsub.f32 0.0, %v1423
  %v1426 = vmin.f32 %v1424, 80.0
  %v1427 = vmin.f32 %v1425, 80.0
  %v1428 = vmul.f32 %v1426, 1.442695
  %v1429 = vpow.pop %v1428
  %v1430 = vmul.f32 %v1427, 1.442695
  %v1431 = vpow.pop %v1430
  %v1432 = vadd.f32 %v1429, 1.0
  %v1433 = vadd.f32 %v1431, 1.0
  %v1434 = vrcp.pop %v1432
  %v1435 = vmul.f32 %v1432, %v1434
  %v1436 = vsub.f32 1.0, %v1435
  %v1437 = vmul.f32 %v1434, %v1436
  %v1438 = vadd.f32 %v1434, %v1437
  %vm1439 = vweird.f32 %v1432
  %vm1440 = vweird.f32 %v1434
  %vm1441 = vmor %vm1439, %vm1440
  %v1442 = vsel %vm1441, %v1434, %v1438
  %v1443 = vand.u32 2147483647, %v1432
  %vm1444 = vcmp.eq.f32.partialorder %v1443, 8.507059e+37
  %v1445 = vand.u32 %v1432, 2147483648
  %v1446 = vor.u32 1.1754944e-38, %v1445
  %v1447 = vsel %vm1444, %v1446, %v1442
  %v1448 = vrcp.pop %v1433
  %v1449 = vmul.f32 %v1433, %v1448
  %v1450 = vsub.f32 1.0, %v1449
  %v1451 = vmul.f32 %v1448, %v1450
  %v1452 = vadd.f32 %v1448, %v1451
  %vm1453 = vweird.f32 %v1433
  %vm1454 = vweird.f32 %v1448
  %vm1455 = vmor %vm1453, %vm1454
  %v1456 = vsel %vm1455, %v1448, %v1452
  %v1457 = vand.u32 2147483647, %v1433
  %vm1458 = vcmp.eq.f32.partialorder %v1457, 8.507059e+37
  %v1459 = vand.u32 %v1433, 2147483648
  %v1460 = vor.u32 1.1754944e-38, %v1459
  %v1461 = vsel %vm1458, %v1460, %v1456
  %v1462 = vmul.f32 %v1422, %v1447
  %v1463 = vmul.f32 %v1423, %v1461
  %s1464 = scalar_lea.vmem %s4, 16
  %1465 = vst [vmem:[%s1464] sm:$0xff] %v1462
  %1466 = vst [vmem:[%s1464 + $0x8] sm:$0xff] %v1463
  // Predicated region
  $region18: #{unet_conv_block.1} parent=0 // pred_check
    _
  $region19: #{unet_conv_block.1} parent=0 // pred_check_branch
    %1468 = sbr.rel (0) target = $region21
  $region20: #{unet_conv_block.1} parent=0 // pred_region
    _
  $region21: #{unet_conv_block.1} parent=0 // pred_fallthru
    _
  // Predicated region
  $region22: #{unet_conv_block.1} parent=0 // pred_check
    _
  $region23: #{unet_conv_block.1} parent=0 // pred_check_branch
    %1470 = sbr.rel (0) target = $region25
  $region24: #{unet_conv_block.1} parent=0 // pred_region
    _
  $region25: #{unet_conv_block.1} parent=0 // pred_fallthru
    _

</llo_original>
